<compile_context>
chip_gen: v5e
topology: v5e:2x2
jax: 0.10.0
libtpu: 0.0.40
codegen_flags: <defaults>
</compile_context>

<pallas_src>
import functools

import jax
import jax.numpy as jnp
from jax import lax
from jax.experimental import pallas as pl
from jax.experimental.pallas import tpu as pltpu

K, STRIDE, PAD, OUT_PAD = 3, 2, 1, 1
C_IN, C_OUT = 128, 64
NEG_SLOPE = 0.01
TAPS = ((0, 0), (0, 1), (1, 0), (1, 1))


def _convt_relu_kernel(x_ref, w_ref, o_ref, *, h, w, cin):
    # x_ref: (h+1, w+1, cin)  bf16 -- padded dense NHWC input (batch squeezed)
    # w_ref: (4, cin, 4*cout) bf16 -- per-tap fused (parity) transposed-conv weight
    # o_ref: (h*w, 4*cout)    f32  -- per-parity output slab (lane-dense)
    m = h * w
    acc = None
    for idx, (dr, dc) in enumerate(TAPS):
        # 2x2 neighborhood tap built in VMEM (no HBM duplication).
        tap = x_ref[dr:dr + h, dc:dc + w, :].reshape(m, cin)
        part = jnp.dot(tap, w_ref[idx], preferred_element_type=jnp.float32)
        acc = part if acc is None else acc + part
    # (v1>0)*v1 == relu(v1); leaky_relu(relu(v1), 0.01) == relu(v1)
    o_ref[...] = jnp.maximum(acc, 0.0)


def _build_tap_weights(w_t):
    """ConvTranspose2d weight (Cin, Cout, 3, 3) -> (4, Cin, 4*Cout) bf16.

    Leading dim: input tap (dr, dc) over the 2x2 neighborhood x_pad[r+dr, c+dc].
    Column blocks: output parity (pr, pc) of out[2r+pr, 2c+pc].
    Contribution uses kernel index (kh, kw) = (pr - 2*dr + 1, pc - 2*dc + 1),
    zero block when that index falls outside [0, 2].
    """
    cin, cout = w_t.shape[0], w_t.shape[1]
    zeros = jnp.zeros((cin, cout), w_t.dtype)
    taps = []
    for dr in (0, 1):
        for dc in (0, 1):
            cols = []
            for pr in (0, 1):
                for pc in (0, 1):
                    kh = pr - 2 * dr + 1
                    kw = pc - 2 * dc + 1
                    ok = (0 <= kh < K) and (0 <= kw < K)
                    cols.append(w_t[:, :, kh, kw] if ok else zeros)
            taps.append(jnp.concatenate(cols, axis=1))          # (Cin, 4*Cout)
    return jnp.stack(taps, axis=0).astype(jnp.bfloat16)         # (4, Cin, 4*Cout)


@jax.jit
def model_forward(x_nchw, w_t):
    """x_nchw: (N, Cin, H, W) f32; w_t: ConvTranspose2d weight (Cin, Cout, 3, 3)."""
    n, cin, h, w = x_nchw.shape
    cout = w_t.shape[1]
    m = h * w

    # NCHW -> NHWC (channels on lanes), bf16 MXU operands; one zero row/col
    # on the bottom/right covers the boundary taps.  Single fused XLA pass.
    x = jnp.transpose(x_nchw, (0, 2, 3, 1)).astype(jnp.bfloat16)
    xp = jnp.pad(x, ((0, 0), (0, 1), (0, 1), (0, 0)))            # (N, H+1, W+1, Cin)

    w_taps = _build_tap_weights(w_t)

    kernel = functools.partial(_convt_relu_kernel, h=h, w=w, cin=cin)

    out_par = pl.pallas_call(
        kernel,
        out_shape=jax.ShapeDtypeStruct((n, m, 4 * cout), jnp.float32),
        grid_spec=pltpu.PrefetchScalarGridSpec(
            num_scalar_prefetch=0,
            grid=(n,),
            in_specs=[
                pl.BlockSpec((None, h + 1, w + 1, cin), lambda b: (b, 0, 0, 0)),
                pl.BlockSpec((4, cin, 4 * cout), lambda b: (0, 0, 0)),
            ],
            out_specs=pl.BlockSpec((None, m, 4 * cout), lambda b: (b, 0, 0)),
        ),
        compiler_params=pltpu.CompilerParams(
            dimension_semantics=("parallel",)),
    )(xp, w_taps)

    # (N, H*W, pr*pc*Cout) -> interleave parities & go NCHW in ONE transpose pass.
    y = out_par.reshape(n, h, w, 2, 2, cout)          # (n, r, c, pr, pc, co)
    y = jnp.transpose(y, (0, 5, 1, 3, 2, 4))          # (n, co, r, pr, c, pc)
    return y.reshape(n, cout, 2 * h, 2 * w)


def reference_forward(x_nchw, w_t):
    """XLA reference on the same bf16-rounded operands, f32 accumulation."""
    xb = x_nchw.astype(jnp.bfloat16).astype(jnp.float32)
    wb = w_t.astype(jnp.bfloat16).astype(jnp.float32)
    w_oihw = jnp.transpose(wb[:, :, ::-1, ::-1], (1, 0, 2, 3))  # (Cout, Cin, K, K)
    pad_lo = K - 1 - PAD
    pad_hi = K - 1 - PAD + OUT_PAD
    v1 = lax.conv_general_dilated(
        xb, w_oihw,
        window_strides=(1, 1),
        padding=((pad_lo, pad_hi), (pad_lo, pad_hi)),
        lhs_dilation=(STRIDE, STRIDE),
        dimension_numbers=("NCHW", "OIHW", "NCHW"),
        precision=lax.Precision.HIGHEST)
    v4 = jnp.where(v1 > 0, v1, 0.0)
    return jnp.where(v4 > 0, v4, NEG_SLOPE * v4)


if __name__ == "__main__":
    key = jax.random.PRNGKey(0)
    kx, kw = jax.random.split(key)

    # Small shapes consistent with the module (channels fixed by __init__).
    N, H, W = 2, 16, 16
    x = jax.random.normal(kx, (N, C_IN, H, W), dtype=jnp.float32)
    # ConvTranspose2d weight shape: (in_channels, out_channels, kH, kW)
    w_t = jax.random.normal(kw, (C_IN, C_OUT, K, K), dtype=jnp.float32) * 0.05

    out = jax.block_until_ready(model_forward(x, w_t))
    assert out.shape == (N, C_OUT, 2 * H, 2 * W), out.shape

    ref = jax.block_until_ready(reference_forward(x, w_t))
    max_err = float(jnp.max(jnp.abs(out - ref)))
    assert jnp.allclose(out, ref, rtol=1e-3, atol=1e-3), max_err

    print("KERNEL_OK")
</pallas_src>

<mosaic_0001>
module attributes {stable_mosaic.version = 11 : i64} {
  func.func @_convt_relu_kernel(%arg0: i32, %arg1: memref<1x17x17x128xbf16, #tpu.memory_space<vmem>>, %arg2: memref<4x128x256xbf16, #tpu.memory_space<vmem>>, %arg3: memref<1x256x256xf32, #tpu.memory_space<vmem>>) attributes {dimension_semantics = [#tpu.dimension_semantics<parallel>], iteration_bounds = array<i64: 2>, scalar_prefetch = 0 : i64, scratch_operands = 0 : i64, tpu.core_type = #tpu.core_type<tc>, window_params = [{transform_indices = @transform_0, window_bounds = array<i64: 1, 17, 17, 128>}, {pipeline_mode = #tpu.pipeline_mode<synchronous>, transform_indices = @transform_1, window_bounds = array<i64: 4, 128, 256>}, {transform_indices = @transform_2, window_bounds = array<i64: 1, 256, 256>}]} {
    %c0 = arith.constant 0 : index
    %c0_0 = arith.constant 0 : index
    %c0_1 = arith.constant 0 : index
    %c0_2 = arith.constant 0 : index
    %0 = vector.load %arg1[%c0, %c0_0, %c0_1, %c0_2] : memref<1x17x17x128xbf16, #tpu.memory_space<vmem>>, vector<1x16x16x128xbf16>
    %1 = vector.shape_cast %0 : vector<1x16x16x128xbf16> to vector<16x16x128xbf16>
    %2 = vector.shape_cast %1 : vector<16x16x128xbf16> to vector<256x128xbf16>
    %c0_3 = arith.constant 0 : index
    %c0_4 = arith.constant 0 : index
    %c0_5 = arith.constant 0 : index
    %3 = vector.load %arg2[%c0_3, %c0_4, %c0_5] : memref<4x128x256xbf16, #tpu.memory_space<vmem>>, vector<1x128x256xbf16>
    %4 = vector.shape_cast %3 : vector<1x128x256xbf16> to vector<128x256xbf16>
    %cst = arith.constant dense<0.000000e+00> : vector<256x256xf32>
    %5 = tpu.matmul %2, %4, %cst {dimension_numbers = #tpu.dot_dimension_numbers<[1], [0], [0], [1], [0, 0, 1, 1], [], []>} : vector<256x128xbf16>, vector<128x256xbf16>, vector<256x256xf32> -> vector<256x256xf32>
    %c0_6 = arith.constant 0 : index
    %c0_7 = arith.constant 0 : index
    %c1 = arith.constant 1 : index
    %c0_8 = arith.constant 0 : index
    %6 = vector.load %arg1[%c0_6, %c0_7, %c1, %c0_8] : memref<1x17x17x128xbf16, #tpu.memory_space<vmem>>, vector<1x16x16x128xbf16>
    %7 = vector.shape_cast %6 : vector<1x16x16x128xbf16> to vector<16x16x128xbf16>
    %8 = vector.shape_cast %7 : vector<16x16x128xbf16> to vector<256x128xbf16>
    %c1_9 = arith.constant 1 : index
    %c0_10 = arith.constant 0 : index
    %c0_11 = arith.constant 0 : index
    %9 = vector.load %arg2[%c1_9, %c0_10, %c0_11] : memref<4x128x256xbf16, #tpu.memory_space<vmem>>, vector<1x128x256xbf16>
    %10 = vector.shape_cast %9 : vector<1x128x256xbf16> to vector<128x256xbf16>
    %cst_12 = arith.constant dense<0.000000e+00> : vector<256x256xf32>
    %11 = tpu.matmul %8, %10, %cst_12 {dimension_numbers = #tpu.dot_dimension_numbers<[1], [0], [0], [1], [0, 0, 1, 1], [], []>} : vector<256x128xbf16>, vector<128x256xbf16>, vector<256x256xf32> -> vector<256x256xf32>
    %12 = arith.addf %5, %11 : vector<256x256xf32>
    %c0_13 = arith.constant 0 : index
    %c1_14 = arith.constant 1 : index
    %c0_15 = arith.constant 0 : index
    %c0_16 = arith.constant 0 : index
    %13 = vector.load %arg1[%c0_13, %c1_14, %c0_15, %c0_16] : memref<1x17x17x128xbf16, #tpu.memory_space<vmem>>, vector<1x16x16x128xbf16>
    %14 = vector.shape_cast %13 : vector<1x16x16x128xbf16> to vector<16x16x128xbf16>
    %15 = vector.shape_cast %14 : vector<16x16x128xbf16> to vector<256x128xbf16>
    %c2 = arith.constant 2 : index
    %c0_17 = arith.constant 0 : index
    %c0_18 = arith.constant 0 : index
    %16 = vector.load %arg2[%c2, %c0_17, %c0_18] : memref<4x128x256xbf16, #tpu.memory_space<vmem>>, vector<1x128x256xbf16>
    %17 = vector.shape_cast %16 : vector<1x128x256xbf16> to vector<128x256xbf16>
    %cst_19 = arith.constant dense<0.000000e+00> : vector<256x256xf32>
    %18 = tpu.matmul %15, %17, %cst_19 {dimension_numbers = #tpu.dot_dimension_numbers<[1], [0], [0], [1], [0, 0, 1, 1], [], []>} : vector<256x128xbf16>, vector<128x256xbf16>, vector<256x256xf32> -> vector<256x256xf32>
    %19 = arith.addf %12, %18 : vector<256x256xf32>
    %c0_20 = arith.constant 0 : index
    %c1_21 = arith.constant 1 : index
    %c1_22 = arith.constant 1 : index
    %c0_23 = arith.constant 0 : index
    %20 = vector.load %arg1[%c0_20, %c1_21, %c1_22, %c0_23] : memref<1x17x17x128xbf16, #tpu.memory_space<vmem>>, vector<1x16x16x128xbf16>
    %21 = vector.shape_cast %20 : vector<1x16x16x128xbf16> to vector<16x16x128xbf16>
    %22 = vector.shape_cast %21 : vector<16x16x128xbf16> to vector<256x128xbf16>
    %c3 = arith.constant 3 : index
    %c0_24 = arith.constant 0 : index
    %c0_25 = arith.constant 0 : index
    %23 = vector.load %arg2[%c3, %c0_24, %c0_25] : memref<4x128x256xbf16, #tpu.memory_space<vmem>>, vector<1x128x256xbf16>
    %24 = vector.shape_cast %23 : vector<1x128x256xbf16> to vector<128x256xbf16>
    %cst_26 = arith.constant dense<0.000000e+00> : vector<256x256xf32>
    %25 = tpu.matmul %22, %24, %cst_26 {dimension_numbers = #tpu.dot_dimension_numbers<[1], [0], [0], [1], [0, 0, 1, 1], [], []>} : vector<256x128xbf16>, vector<128x256xbf16>, vector<256x256xf32> -> vector<256x256xf32>
    %26 = arith.addf %19, %25 : vector<256x256xf32>
    %cst_27 = arith.constant 0.000000e+00 : f32
    %27 = vector.broadcast %cst_27 : f32 to vector<256x256xf32>
    %28 = arith.maximumf %26, %27 : vector<256x256xf32>
    %c0_28 = arith.constant 0 : index
    %c0_29 = arith.constant 0 : index
    %c0_30 = arith.constant 0 : index
    %29 = vector.load %arg3[%c0_28, %c0_29, %c0_30] : memref<1x256x256xf32, #tpu.memory_space<vmem>>, vector<1x256x256xf32>
    %30 = vector.shape_cast %29 : vector<1x256x256xf32> to vector<256x256xf32>
    %31 = vector.shape_cast %28 : vector<256x256xf32> to vector<1x256x256xf32>
    tpu.vector_store %arg3[%c0_28, %c0_29, %c0_30], %31 {strides = array<i32>} : memref<1x256x256xf32, #tpu.memory_space<vmem>>, vector<1x256x256xf32>,
    return
  }
  func.func @transform_0(%arg0: i32) -> (i32, i32, i32, i32) {
    %c0_i32 = arith.constant 0 : i32
    %c0_i32_0 = arith.constant 0 : i32
    %c0_i32_1 = arith.constant 0 : i32
    %c0_i32_2 = arith.constant 0 : i32
    return %arg0, %c0_i32, %c0_i32_0, %c0_i32_1 : i32, i32, i32, i32
  }
  func.func @transform_1(%arg0: i32) -> (i32, i32, i32) {
    %c0_i32 = arith.constant 0 : i32
    %c0_i32_0 = arith.constant 0 : i32
    %c0_i32_1 = arith.constant 0 : i32
    %c0_i32_2 = arith.constant 0 : i32
    return %c0_i32, %c0_i32_0, %c0_i32_1 : i32, i32, i32
  }
  func.func @transform_2(%arg0: i32) -> (i32, i32, i32) {
    %c0_i32 = arith.constant 0 : i32
    %c0_i32_0 = arith.constant 0 : i32
    %c0_i32_1 = arith.constant 0 : i32
    return %arg0, %c0_i32, %c0_i32_0 : i32, i32, i32
  }
}

</mosaic_0001>

<llo_original>
// kernel: model_forward.1
$region0: #{model_forward.1}
  #allocation0 [shape = 'u32[]', space=smem, size = 0x4, offset = 0x4, fixed_abs, tag = 'smem constant byte address 0x4 - core index']
  #allocation1 [shape = 'u32[72,128]{1,0:T(1,128)}', space=vmem, size = 0x9000, scoped, tag = 'internal scratch']
  %s0 = inlined_call_operand.vmem [shape: bf16[2,17,17,128], index: 0, kind: input, shape index: {}]
  %s1 = inlined_call_operand.vmem [shape: bf16[4,128,256], index: 1, kind: input, shape index: {}]
  %s2 = inlined_call_operand.vmem [shape: f32[2,256,256], index: 2, kind: output, shape index: {}]
  %s3 = sld [smem:[#allocation0]]
  $region41: #{model_forward.1} parent=0
    _
  %s5 = ssub.s32 1, %s3
  %s6 = scalar_select 0, %s5, %s3
  loop: start=0, step=1, limit=4
  $region2: #{model_forward.1} parent=0 // loop_pre_header
    _
  $region3: #{model_forward.1} parent=0 // loop_header
    %s8 = sphi 0, %s12
    %p9 = scmp.ge.s32.totalorder %s8, 4
    %s18 = sphi 0, %s20
    %s21 = sphi 0, %s18
    %s22 = sphi 0, %s21
    %s38 = sphi 0, %s22
    %s42 = sphi 0, %s42
    %s44 = sphi 0, %s42
    %s45 = sphi 0, %s44
    %s59 = sphi 0, %s45
    %s65 = sphi 0, %s67
    %s68 = sphi 0, %s65
    %s69 = sphi 0, %s68
    %s85 = sphi 0, %s69
  $region4: #{model_forward.1} parent=0 // loop_header_branch
    %11 = sbr.rel (%p9) target = $region8
  $region5: #{model_forward.1} parent=0 // loop_body
    %s13 = ssub.s32 %s8, 1
    %s14 = ssub.s32 %s8, 2
    %s15 = sadd.s32 %s8, 1
    %s16 = ssub.s32 %s8, %s15
    %p17 = scmp.eq.s32.totalorder %s16, 0
    %s19 = sadd.s32 %s18, 1
    %s20 = scalar_select %p17, %s18, %s19
    %p23 = pneg %p17
    %p24 = scmp.eq.s32.totalorder %s8, 1
    %p25 = por %p23, %p24
    %p26 = scmp.ne.s32.totalorder %s18, %s21
    %p27 = scmp.eq.s32.totalorder %s8, 0
    %p28 = por %p26, %p27
    %p29 = scmp.ne.s32.totalorder %s18, %s21
    %p30 = scmp.eq.s32.totalorder %s13, 1
    %p31 = por %p29, %p30
    %p32 = scmp.ne.s32.totalorder %s21, %s22
    %p33 = scmp.eq.s32.totalorder %s13, 0
    %p34 = por %p32, %p33
    %p35 = scmp.ne.s32.totalorder %s21, %s22
    %p36 = scmp.eq.s32.totalorder %s14, 1
    %p37 = por %p35, %p36
    %p39 = scmp.ne.s32.totalorder %s22, %s38
    %p40 = scmp.eq.s32.totalorder %s14, 0
    %p41 = por %p39, %p40
    %s43 = sadd.s32 %s42, 1
    %p46 = scmp.eq.s32.totalorder %s8, 1
    %p47 = scmp.ne.s32.totalorder %s42, %s44
    %p48 = scmp.eq.s32.totalorder %s8, 0
    %p49 = por %p47, %p48
    %p50 = scmp.ne.s32.totalorder %s42, %s44
    %p51 = scmp.eq.s32.totalorder %s13, 1
    %p52 = por %p50, %p51
    %p53 = scmp.ne.s32.totalorder %s44, %s45
    %p54 = scmp.eq.s32.totalorder %s13, 0
    %p55 = por %p53, %p54
    %p56 = scmp.ne.s32.totalorder %s44, %s45
    %p57 = scmp.eq.s32.totalorder %s14, 1
    %p58 = por %p56, %p57
    %p60 = scmp.ne.s32.totalorder %s45, %s59
    %p61 = scmp.eq.s32.totalorder %s14, 0
    %p62 = por %p60, %p61
    %s63 = ssub.s32 %s8, %s15
    %p64 = scmp.eq.s32.totalorder %s63, 0
    %s66 = sadd.s32 %s65, 1
    %s67 = scalar_select %p64, %s65, %s66
    %p70 = pneg %p64
    %p71 = scmp.eq.s32.totalorder %s8, 1
    %p72 = por %p70, %p71
    %p73 = scmp.ne.s32.totalorder %s65, %s68
    %p74 = scmp.eq.s32.totalorder %s8, 0
    %p75 = por %p73, %p74
    %p76 = scmp.ne.s32.totalorder %s65, %s68
    %p77 = scmp.eq.s32.totalorder %s13, 1
    %p78 = por %p76, %p77
    %p79 = scmp.ne.s32.totalorder %s68, %s69
    %p80 = scmp.eq.s32.totalorder %s13, 0
    %p81 = por %p79, %p80
    %p82 = scmp.ne.s32.totalorder %s68, %s69
    %p83 = scmp.eq.s32.totalorder %s14, 1
    %p84 = por %p82, %p83
    %p86 = scmp.ne.s32.totalorder %s69, %s85
    %p87 = scmp.eq.s32.totalorder %s14, 0
    %p88 = por %p86, %p87
    %p89 = scmp.le.s32.totalorder 1, %s8
    %p90 = scmp.lt.s32.totalorder %s8, 3
    %p91 = pnand %p89, %p90
    %p92 = pneg %p91
    // Predicated region
    $region9: #{model_forward.1} parent=5 // pred_check
      _
    $region10: #{model_forward.1} parent=5 // pred_check_branch
      %94 = sbr.rel (%p91) target = $region12
    $region11: #{model_forward.1} parent=5 // pred_region
      %s95 = ssub.s32 %s8, 1
      // Predicated region
      $region13: #{model_forward.1} parent=11 // pred_check
        %p96 = pneg %p55
      $region14: #{model_forward.1} parent=11 // pred_check_branch
        %98 = sbr.rel (%p96) target = $region16
      $region15: #{model_forward.1} parent=11 // pred_region
        _
      $region16: #{model_forward.1} parent=11 // pred_fallthru
        _
    $region12: #{model_forward.1} parent=5 // pred_fallthru
      _
    %p99 = scmp.lt.s32.totalorder %s8, 2
    // Predicated region
    $region17: #{model_forward.1} parent=5 // pred_check
      %p100 = pneg %p99
    $region18: #{model_forward.1} parent=5 // pred_check_branch
      %102 = sbr.rel (%p100) target = $region20
    $region19: #{model_forward.1} parent=5 // pred_region
      // Predicated region
      $region21: #{model_forward.1} parent=19 // pred_check
        %p103 = pneg %p28
      $region22: #{model_forward.1} parent=19 // pred_check_branch
        %105 = sbr.rel (%p103) target = $region24
      $region23: #{model_forward.1} parent=19 // pred_region
        %p106 = scmp.lt.s32.totalorder %s8, 1
        %s107 = scalar_select %p106, %s8, 1
        %s108 = smul.addr %s107, 51
        %s109 = smul.addr %s108, 4
        %s110 = scalar_lea.vmem %s0, %s109
      $region24: #{model_forward.1} parent=19 // pred_fallthru
        _
    $region20: #{model_forward.1} parent=5 // pred_fallthru
      _
    %p111 = scmp.le.s32.totalorder 1, %s8
    %p112 = scmp.lt.s32.totalorder %s8, 3
    %p113 = pnand %p111, %p112
    %p114 = pneg %p113
    // Predicated region
    $region25: #{model_forward.1} parent=5 // pred_check
      _
    $region26: #{model_forward.1} parent=5 // pred_check_branch
      %116 = sbr.rel (%p113) target = $region28
    $region27: #{model_forward.1} parent=5 // pred_region
      %s117 = ssub.s32 %s8, 1
      %p118 = scmp.lt.s32.totalorder %s13, 1
      %s119 = scalar_select %p118, %s13, 1
      %s120 = smul.addr %s119, 51
      %s121 = smul.addr %s120, 4
      %s122 = scalar_lea.vmem %s0, %s121
      %p123 = pneg %p34
      %p124 = pneg %p31
      %p125 = pneg %p55
      %p126 = pneg %p52
      %p127 = pneg %p81
      %p128 = pneg %p78
      %p129 = scmp.lt.s32.totalorder %s13, 1
      %s130 = scalar_select %p129, %s13, 1
      %s131 = smul.addr %s130, 64
      %s132 = smul.addr %s131, 8
      %s133 = scalar_lea.vmem %s2, %s132
      %p134 = scmp.lt.s32.totalorder %s13, 1
      %s135 = scalar_select %p134, %s13, 1
      %s136 = smul.addr %s135, 51
      %s137 = smul.addr %s136, 4
      %s138 = scalar_lea.vmem %s0, %s137
      %p139 = scmp.lt.s32.totalorder %s13, 1
      %s140 = scalar_select %p139, %s13, 1
      %s141 = smul.addr %s140, 64
      %s142 = smul.addr %s141, 8
      %s143 = scalar_lea.vmem %s2, %s142
      %v144 = vld [vmem:[%s138] sm:$0xf]
      %v145 = vld [vmem:[%s138 + $0x4] sm:$0xf]
      %v146 = vld [vmem:[%s138 + $0xc] sm:$0xf]
      %v147 = vld [vmem:[%s138 + $0x10] sm:$0xf]
      %v148 = vld [vmem:[%s138 + $0x18] sm:$0xf]
      %v149 = vld [vmem:[%s138 + $0x1c] sm:$0xf]
      %v150 = vld [vmem:[%s138 + $0x24] sm:$0xf]
      %v151 = vld [vmem:[%s138 + $0x28] sm:$0xf]
      %v152 = vld [vmem:[%s138 + $0x30] sm:$0xf]
      %v153 = vld [vmem:[%s138 + $0x34] sm:$0xf]
      %v154 = vld [vmem:[%s138 + $0x3c] sm:$0xf]
      %v155 = vld [vmem:[%s138 + $0x40] sm:$0xf]
      %v156 = vld [vmem:[%s138 + $0x48] sm:$0xf]
      %v157 = vld [vmem:[%s138 + $0x4c] sm:$0xf]
      %v158 = vld [vmem:[%s138 + $0x54] sm:$0xf]
      %v159 = vld [vmem:[%s138 + $0x58] sm:$0xf]
      %v160 = vld [vmem:[%s138 + $0x60] sm:$0xf]
      %v161 = vld [vmem:[%s138 + $0x64] sm:$0xf]
      %v162 = vld [vmem:[%s138 + $0x6c] sm:$0xf]
      %v163 = vld [vmem:[%s138 + $0x70] sm:$0xf]
      %v164 = vld [vmem:[%s138 + $0x78] sm:$0xf]
      %v165 = vld [vmem:[%s138 + $0x7c] sm:$0xf]
      %v166 = vld [vmem:[%s138 + $0x84] sm:$0xf]
      %v167 = vld [vmem:[%s138 + $0x88] sm:$0xf]
      %v168 = vld [vmem:[%s138 + $0x90] sm:$0xf]
      %v169 = vld [vmem:[%s138 + $0x94] sm:$0xf]
      %v170 = vld [vmem:[%s138 + $0x9c] sm:$0xf]
      %v171 = vld [vmem:[%s138 + $0xa0] sm:$0xf]
      %v172 = vld [vmem:[%s138 + $0xa8] sm:$0xf]
      %v173 = vld [vmem:[%s138 + $0xac] sm:$0xf]
      %v174 = vld [vmem:[%s138 + $0xb4] sm:$0xf]
      %v175 = vld [vmem:[%s138 + $0xb8] sm:$0xf]
      %v176 = vld [vmem:[%s1] sm:$0xff]
      %v177 = vld [vmem:[%s1 + $0x8] sm:$0xff]
      %v178 = vld [vmem:[%s1 + $0x10] sm:$0xff]
      %v179 = vld [vmem:[%s1 + $0x18] sm:$0xff]
      %v180 = vld [vmem:[%s1 + $0x20] sm:$0xff]
      %v181 = vld [vmem:[%s1 + $0x28] sm:$0xff]
      %v182 = vld [vmem:[%s1 + $0x30] sm:$0xff]
      %v183 = vld [vmem:[%s1 + $0x38] sm:$0xff]
      %v184 = vld [vmem:[%s1 + $0x40] sm:$0xff]
      %v185 = vld [vmem:[%s1 + $0x48] sm:$0xff]
      %v186 = vld [vmem:[%s1 + $0x50] sm:$0xff]
      %v187 = vld [vmem:[%s1 + $0x58] sm:$0xff]
      %v188 = vld [vmem:[%s1 + $0x60] sm:$0xff]
      %v189 = vld [vmem:[%s1 + $0x68] sm:$0xff]
      %v190 = vld [vmem:[%s1 + $0x70] sm:$0xff]
      %v191 = vld [vmem:[%s1 + $0x78] sm:$0xff]
      %v192 = vld [vmem:[%s138 + $0x8] sm:$0x1]
      %v193 = vld [vmem:[%s138 + $0x14] sm:$0x1]
      %v194 = vld [vmem:[%s138 + $0x20] sm:$0x1]
      %v195 = vld [vmem:[%s138 + $0x2c] sm:$0x1]
      %v196 = vld [vmem:[%s138 + $0x38] sm:$0x1]
      %v197 = vld [vmem:[%s138 + $0x44] sm:$0x1]
      %v198 = vld [vmem:[%s138 + $0x50] sm:$0x1]
      %v199 = vld [vmem:[%s138 + $0x5c] sm:$0x1]
      %v200 = vld [vmem:[%s138 + $0x68] sm:$0x1]
      %v201 = vld [vmem:[%s138 + $0x74] sm:$0x1]
      %v202 = vld [vmem:[%s138 + $0x80] sm:$0x1]
      %v203 = vld [vmem:[%s138 + $0x8c] sm:$0x1]
      %v204 = vld [vmem:[%s138 + $0x98] sm:$0x1]
      %v205 = vld [vmem:[%s138 + $0xa4] sm:$0x1]
      %v206 = vld [vmem:[%s138 + $0xb0] sm:$0x1]
      %v207 = vld [vmem:[%s138 + $0xbc] sm:$0x1]
      %vm208 = vsmask.f32 3328
      %vm209 = vsmask.f32 7440
      %vm210 = vmor %vm208, %vm209
      %v212 = vshrl.u32 %v144, 16
      %v214 = vrot.slane %v212, 4
      %v215 = vshll.u32 %v144, 16
      %v217 = vrot.slane %v215, 5
      %v218 = vor.u32 %v214, %v217
      %v219 = vrot.slane %v218, 4
      %v221 = vshll.u32 %v145, 16
      %v223 = vrot.slane %v221, 5
      %v224 = vsel %vm210, %v219, %v223
      %v225 = vshrl.u32 %v145, 16
      %v227 = vrot.slane %v225, 4
      %v228 = vor.u32 %v227, %v223
      %v229 = vrot.slane %v228, 4
      %v231 = vshll.u32 %v192, 16
      %v233 = vrot.slane %v231, 5
      %v234 = vsel %vm210, %v229, %v233
      %v236 = vshrl.u32 %v146, 16
      %v238 = vrot.slane %v236, 4
      %v239 = vshll.u32 %v146, 16
      %v241 = vrot.slane %v239, 5
      %v242 = vor.u32 %v238, %v241
      %v243 = vrot.slane %v242, 4
      %v245 = vshll.u32 %v147, 16
      %v247 = vrot.slane %v245, 5
      %v248 = vsel %vm210, %v243, %v247
      %v249 = vshrl.u32 %v147, 16
      %v251 = vrot.slane %v249, 4
      %v252 = vor.u32 %v251, %v247
      %v253 = vrot.slane %v252, 4
      %v255 = vshll.u32 %v193, 16
      %v257 = vrot.slane %v255, 5
      %v258 = vsel %vm210, %v253, %v257
      %v260 = vshrl.u32 %v148, 16
      %v262 = vrot.slane %v260, 4
      %v263 = vshll.u32 %v148, 16
      %v265 = vrot.slane %v263, 5
      %v266 = vor.u32 %v262, %v265
      %v267 = vrot.slane %v266, 4
      %v269 = vshll.u32 %v149, 16
      %v271 = vrot.slane %v269, 5
      %v272 = vsel %vm210, %v267, %v271
      %v273 = vshrl.u32 %v149, 16
      %v275 = vrot.slane %v273, 4
      %v276 = vor.u32 %v275, %v271
      %v277 = vrot.slane %v276, 4
      %v279 = vshll.u32 %v194, 16
      %v281 = vrot.slane %v279, 5
      %v282 = vsel %vm210, %v277, %v281
      %v284 = vshrl.u32 %v150, 16
      %v286 = vrot.slane %v284, 4
      %v287 = vshll.u32 %v150, 16
      %v289 = vrot.slane %v287, 5
      %v290 = vor.u32 %v286, %v289
      %v291 = vrot.slane %v290, 4
      %v293 = vshll.u32 %v151, 16
      %v295 = vrot.slane %v293, 5
      %v296 = vsel %vm210, %v291, %v295
      %v297 = vshrl.u32 %v151, 16
      %v299 = vrot.slane %v297, 4
      %v300 = vor.u32 %v299, %v295
      %v301 = vrot.slane %v300, 4
      %v303 = vshll.u32 %v195, 16
      %v305 = vrot.slane %v303, 5
      %v306 = vsel %vm210, %v301, %v305
      %v308 = vshrl.u32 %v152, 16
      %v310 = vrot.slane %v308, 4
      %v311 = vshll.u32 %v152, 16
      %v313 = vrot.slane %v311, 5
      %v314 = vor.u32 %v310, %v313
      %v315 = vrot.slane %v314, 4
      %v317 = vshll.u32 %v153, 16
      %v319 = vrot.slane %v317, 5
      %v320 = vsel %vm210, %v315, %v319
      %v321 = vshrl.u32 %v153, 16
      %v323 = vrot.slane %v321, 4
      %v324 = vor.u32 %v323, %v319
      %v325 = vrot.slane %v324, 4
      %v327 = vshll.u32 %v196, 16
      %v329 = vrot.slane %v327, 5
      %v330 = vsel %vm210, %v325, %v329
      %v332 = vshrl.u32 %v154, 16
      %v334 = vrot.slane %v332, 4
      %v335 = vshll.u32 %v154, 16
      %v337 = vrot.slane %v335, 5
      %v338 = vor.u32 %v334, %v337
      %v339 = vrot.slane %v338, 4
      %v341 = vshll.u32 %v155, 16
      %v343 = vrot.slane %v341, 5
      %v344 = vsel %vm210, %v339, %v343
      %v345 = vshrl.u32 %v155, 16
      %v347 = vrot.slane %v345, 4
      %v348 = vor.u32 %v347, %v343
      %v349 = vrot.slane %v348, 4
      %v351 = vshll.u32 %v197, 16
      %v353 = vrot.slane %v351, 5
      %v354 = vsel %vm210, %v349, %v353
      %v356 = vshrl.u32 %v156, 16
      %v358 = vrot.slane %v356, 4
      %v359 = vshll.u32 %v156, 16
      %v361 = vrot.slane %v359, 5
      %v362 = vor.u32 %v358, %v361
      %v363 = vrot.slane %v362, 4
      %v365 = vshll.u32 %v157, 16
      %v367 = vrot.slane %v365, 5
      %v368 = vsel %vm210, %v363, %v367
      %v369 = vshrl.u32 %v157, 16
      %v371 = vrot.slane %v369, 4
      %v372 = vor.u32 %v371, %v367
      %v373 = vrot.slane %v372, 4
      %v375 = vshll.u32 %v198, 16
      %v377 = vrot.slane %v375, 5
      %v378 = vsel %vm210, %v373, %v377
      %v380 = vshrl.u32 %v158, 16
      %v382 = vrot.slane %v380, 4
      %v383 = vshll.u32 %v158, 16
      %v385 = vrot.slane %v383, 5
      %v386 = vor.u32 %v382, %v385
      %v387 = vrot.slane %v386, 4
      %v389 = vshll.u32 %v159, 16
      %v391 = vrot.slane %v389, 5
      %v392 = vsel %vm210, %v387, %v391
      %v393 = vshrl.u32 %v159, 16
      %v395 = vrot.slane %v393, 4
      %v396 = vor.u32 %v395, %v391
      %v397 = vrot.slane %v396, 4
      %v399 = vshll.u32 %v199, 16
      %v401 = vrot.slane %v399, 5
      %v402 = vsel %vm210, %v397, %v401
      %v404 = vshrl.u32 %v160, 16
      %v406 = vrot.slane %v404, 4
      %v407 = vshll.u32 %v160, 16
      %v409 = vrot.slane %v407, 5
      %v410 = vor.u32 %v406, %v409
      %v411 = vrot.slane %v410, 4
      %v413 = vshll.u32 %v161, 16
      %v415 = vrot.slane %v413, 5
      %v416 = vsel %vm210, %v411, %v415
      %v417 = vshrl.u32 %v161, 16
      %v419 = vrot.slane %v417, 4
      %v420 = vor.u32 %v419, %v415
      %v421 = vrot.slane %v420, 4
      %v423 = vshll.u32 %v200, 16
      %v425 = vrot.slane %v423, 5
      %v426 = vsel %vm210, %v421, %v425
      %v428 = vshrl.u32 %v162, 16
      %v430 = vrot.slane %v428, 4
      %v431 = vshll.u32 %v162, 16
      %v433 = vrot.slane %v431, 5
      %v434 = vor.u32 %v430, %v433
      %v435 = vrot.slane %v434, 4
      %v437 = vshll.u32 %v163, 16
      %v439 = vrot.slane %v437, 5
      %v440 = vsel %vm210, %v435, %v439
      %v441 = vshrl.u32 %v163, 16
      %v443 = vrot.slane %v441, 4
      %v444 = vor.u32 %v443, %v439
      %v445 = vrot.slane %v444, 4
      %v447 = vshll.u32 %v201, 16
      %v449 = vrot.slane %v447, 5
      %v450 = vsel %vm210, %v445, %v449
      %v452 = vshrl.u32 %v164, 16
      %v454 = vrot.slane %v452, 4
      %v455 = vshll.u32 %v164, 16
      %v457 = vrot.slane %v455, 5
      %v458 = vor.u32 %v454, %v457
      %v459 = vrot.slane %v458, 4
      %v461 = vshll.u32 %v165, 16
      %v463 = vrot.slane %v461, 5
      %v464 = vsel %vm210, %v459, %v463
      %v465 = vshrl.u32 %v165, 16
      %v467 = vrot.slane %v465, 4
      %v468 = vor.u32 %v467, %v463
      %v469 = vrot.slane %v468, 4
      %v471 = vshll.u32 %v202, 16
      %v473 = vrot.slane %v471, 5
      %v474 = vsel %vm210, %v469, %v473
      %v476 = vshrl.u32 %v166, 16
      %v478 = vrot.slane %v476, 4
      %v479 = vshll.u32 %v166, 16
      %v481 = vrot.slane %v479, 5
      %v482 = vor.u32 %v478, %v481
      %v483 = vrot.slane %v482, 4
      %v485 = vshll.u32 %v167, 16
      %v487 = vrot.slane %v485, 5
      %v488 = vsel %vm210, %v483, %v487
      %v489 = vshrl.u32 %v167, 16
      %v491 = vrot.slane %v489, 4
      %v492 = vor.u32 %v491, %v487
      %v493 = vrot.slane %v492, 4
      %v495 = vshll.u32 %v203, 16
      %v497 = vrot.slane %v495, 5
      %v498 = vsel %vm210, %v493, %v497
      %v500 = vshrl.u32 %v168, 16
      %v502 = vrot.slane %v500, 4
      %v503 = vshll.u32 %v168, 16
      %v505 = vrot.slane %v503, 5
      %v506 = vor.u32 %v502, %v505
      %v507 = vrot.slane %v506, 4
      %v509 = vshll.u32 %v169, 16
      %v511 = vrot.slane %v509, 5
      %v512 = vsel %vm210, %v507, %v511
      %v513 = vshrl.u32 %v169, 16
      %v515 = vrot.slane %v513, 4
      %v516 = vor.u32 %v515, %v511
      %v517 = vrot.slane %v516, 4
      %v519 = vshll.u32 %v204, 16
      %v521 = vrot.slane %v519, 5
      %v522 = vsel %vm210, %v517, %v521
      %v524 = vshrl.u32 %v170, 16
      %v526 = vrot.slane %v524, 4
      %v527 = vshll.u32 %v170, 16
      %v529 = vrot.slane %v527, 5
      %v530 = vor.u32 %v526, %v529
      %v531 = vrot.slane %v530, 4
      %v533 = vshll.u32 %v171, 16
      %v535 = vrot.slane %v533, 5
      %v536 = vsel %vm210, %v531, %v535
      %v537 = vshrl.u32 %v171, 16
      %v539 = vrot.slane %v537, 4
      %v540 = vor.u32 %v539, %v535
      %v541 = vrot.slane %v540, 4
      %v543 = vshll.u32 %v205, 16
      %v545 = vrot.slane %v543, 5
      %v546 = vsel %vm210, %v541, %v545
      %v548 = vshrl.u32 %v172, 16
      %v550 = vrot.slane %v548, 4
      %v551 = vshll.u32 %v172, 16
      %v553 = vrot.slane %v551, 5
      %v554 = vor.u32 %v550, %v553
      %v555 = vrot.slane %v554, 4
      %v557 = vshll.u32 %v173, 16
      %v559 = vrot.slane %v557, 5
      %v560 = vsel %vm210, %v555, %v559
      %v561 = vshrl.u32 %v173, 16
      %v563 = vrot.slane %v561, 4
      %v564 = vor.u32 %v563, %v559
      %v565 = vrot.slane %v564, 4
      %v567 = vshll.u32 %v206, 16
      %v569 = vrot.slane %v567, 5
      %v570 = vsel %vm210, %v565, %v569
      %v572 = vshrl.u32 %v174, 16
      %v574 = vrot.slane %v572, 4
      %v575 = vshll.u32 %v174, 16
      %v577 = vrot.slane %v575, 5
      %v578 = vor.u32 %v574, %v577
      %v579 = vrot.slane %v578, 4
      %v581 = vshll.u32 %v175, 16
      %v583 = vrot.slane %v581, 5
      %v584 = vsel %vm210, %v579, %v583
      %v585 = vshrl.u32 %v175, 16
      %v587 = vrot.slane %v585, 4
      %v588 = vor.u32 %v587, %v583
      %v589 = vrot.slane %v588, 4
      %v591 = vshll.u32 %v207, 16
      %v593 = vrot.slane %v591, 5
      %v594 = vsel %vm210, %v589, %v593
      %s595 = scalar_lea.vmem %s1, 128
      %v596 = vld [vmem:[%s595] sm:$0xff]
      %v597 = vld [vmem:[%s595 + $0x8] sm:$0xff]
      %v598 = vld [vmem:[%s595 + $0x10] sm:$0xff]
      %v599 = vld [vmem:[%s595 + $0x18] sm:$0xff]
      %v600 = vld [vmem:[%s595 + $0x20] sm:$0xff]
      %v601 = vld [vmem:[%s595 + $0x28] sm:$0xff]
      %v602 = vld [vmem:[%s595 + $0x30] sm:$0xff]
      %v603 = vld [vmem:[%s595 + $0x38] sm:$0xff]
      %v604 = vld [vmem:[%s595 + $0x40] sm:$0xff]
      %v605 = vld [vmem:[%s595 + $0x48] sm:$0xff]
      %v606 = vld [vmem:[%s595 + $0x50] sm:$0xff]
      %v607 = vld [vmem:[%s595 + $0x58] sm:$0xff]
      %v608 = vld [vmem:[%s595 + $0x60] sm:$0xff]
      %v609 = vld [vmem:[%s595 + $0x68] sm:$0xff]
      %v610 = vld [vmem:[%s595 + $0x70] sm:$0xff]
      %v611 = vld [vmem:[%s595 + $0x78] sm:$0xff]
      %v612 = vunpack.c.l.b16 %v224
      %v613 = vunpack.c.l.b16 %v234
      %v614 = vunpack.c.l.b16 %v248
      %v615 = vunpack.c.l.b16 %v258
      %v616 = vunpack.c.l.b16 %v272
      %v617 = vunpack.c.l.b16 %v282
      %v618 = vunpack.c.l.b16 %v296
      %v619 = vunpack.c.l.b16 %v306
      %v620 = vunpack.c.l.b16 %v320
      %v621 = vunpack.c.l.b16 %v330
      %v622 = vunpack.c.l.b16 %v344
      %v623 = vunpack.c.l.b16 %v354
      %v624 = vunpack.c.l.b16 %v368
      %v625 = vunpack.c.l.b16 %v378
      %v626 = vunpack.c.l.b16 %v392
      %v627 = vunpack.c.l.b16 %v402
      %v628 = vunpack.c.l.b16 %v416
      %v629 = vunpack.c.l.b16 %v426
      %v630 = vunpack.c.l.b16 %v440
      %v631 = vunpack.c.l.b16 %v450
      %v632 = vunpack.c.l.b16 %v464
      %v633 = vunpack.c.l.b16 %v474
      %v634 = vunpack.c.l.b16 %v488
      %v635 = vunpack.c.l.b16 %v498
      %v636 = vunpack.c.l.b16 %v512
      %v637 = vunpack.c.l.b16 %v522
      %v638 = vunpack.c.l.b16 %v536
      %v639 = vunpack.c.l.b16 %v546
      %v640 = vunpack.c.l.b16 %v560
      %v641 = vunpack.c.l.b16 %v570
      %v642 = vunpack.c.l.b16 %v584
      %v643 = vunpack.c.l.b16 %v594
      %v644 = vpack.c.b16 %v613, %v612
      %v645 = vpack.c.b16 %v615, %v614
      %v646 = vpack.c.b16 %v617, %v616
      %v647 = vpack.c.b16 %v619, %v618
      %v648 = vpack.c.b16 %v621, %v620
      %v649 = vpack.c.b16 %v623, %v622
      %v650 = vpack.c.b16 %v625, %v624
      %v651 = vpack.c.b16 %v627, %v626
      %v652 = vpack.c.b16 %v629, %v628
      %v653 = vpack.c.b16 %v631, %v630
      %v654 = vpack.c.b16 %v633, %v632
      %v655 = vpack.c.b16 %v635, %v634
      %v656 = vpack.c.b16 %v637, %v636
      %v657 = vpack.c.b16 %v639, %v638
      %v658 = vpack.c.b16 %v641, %v640
      %v659 = vpack.c.b16 %v643, %v642
      %v692 = vunpack.c.l.b16 %v596
      %v693 = vunpack.c.h.b16 %v596
      %v694 = vunpack.c.l.b16 %v597
      %v695 = vunpack.c.h.b16 %v597
      %v696 = vunpack.c.l.b16 %v598
      %v697 = vunpack.c.h.b16 %v598
      %v698 = vunpack.c.l.b16 %v599
      %v699 = vunpack.c.h.b16 %v599
      %v700 = vunpack.c.l.b16 %v600
      %v701 = vunpack.c.h.b16 %v600
      %v702 = vunpack.c.l.b16 %v601
      %v703 = vunpack.c.h.b16 %v601
      %v704 = vunpack.c.l.b16 %v602
      %v705 = vunpack.c.h.b16 %v602
      %v706 = vunpack.c.l.b16 %v603
      %v707 = vunpack.c.h.b16 %v603
      %v708 = vunpack.c.l.b16 %v604
      %v709 = vunpack.c.h.b16 %v604
      %v710 = vunpack.c.l.b16 %v605
      %v711 = vunpack.c.h.b16 %v605
      %v712 = vunpack.c.l.b16 %v606
      %v713 = vunpack.c.h.b16 %v606
      %v714 = vunpack.c.l.b16 %v607
      %v715 = vunpack.c.h.b16 %v607
      %v716 = vunpack.c.l.b16 %v608
      %v717 = vunpack.c.h.b16 %v608
      %v718 = vunpack.c.l.b16 %v609
      %v719 = vunpack.c.h.b16 %v609
      %v720 = vunpack.c.l.b16 %v610
      %v721 = vunpack.c.h.b16 %v610
      %v722 = vunpack.c.l.b16 %v611
      %v723 = vunpack.c.h.b16 %v611
      %v724 = vpack.c.b16 %v694, %v692
      %v725 = vpack.c.b16 %v695, %v693
      %v726 = vpack.c.b16 %v698, %v696
      %v727 = vpack.c.b16 %v699, %v697
      %v728 = vpack.c.b16 %v702, %v700
      %v729 = vpack.c.b16 %v703, %v701
      %v730 = vpack.c.b16 %v706, %v704
      %v731 = vpack.c.b16 %v707, %v705
      %v732 = vpack.c.b16 %v710, %v708
      %v733 = vpack.c.b16 %v711, %v709
      %v734 = vpack.c.b16 %v714, %v712
      %v735 = vpack.c.b16 %v715, %v713
      %v736 = vpack.c.b16 %v718, %v716
      %v737 = vpack.c.b16 %v719, %v717
      %v738 = vpack.c.b16 %v722, %v720
      %v739 = vpack.c.b16 %v723, %v721
      %756 = vmatpush.bf16.msra.mxu0 %v738
      %757 = vmatpush.bf16.msra.mxu0 %v736
      %758 = vmatpush.bf16.msra.mxu0 %v734
      %759 = vmatpush.bf16.msra.mxu0 %v732
      %760 = vmatpush.bf16.msra.mxu0 %v730
      %761 = vmatpush.bf16.msra.mxu0 %v728
      %762 = vmatpush.bf16.msra.mxu0 %v726
      %763 = vmatpush.bf16.msra.mxu0 %v724
      %764 = vmatmul.bf16.gmra.mxu0 %v644
      %v765 = vpop.f32.mrf.mxu0
      %v766 = vadd.f32 0.0, %v765
      %v767 = vpop.f32.mrf.mxu0
      %v768 = vadd.f32 0.0, %v767
      %769 = vmatmul.bf16.gmra.mxu0 %v645
      %v770 = vpop.f32.mrf.mxu0
      %v771 = vadd.f32 0.0, %v770
      %v772 = vpop.f32.mrf.mxu0
      %v773 = vadd.f32 0.0, %v772
      %774 = vmatmul.bf16.gmra.mxu0 %v646
      %v775 = vpop.f32.mrf.mxu0
      %v776 = vadd.f32 0.0, %v775
      %v777 = vpop.f32.mrf.mxu0
      %v778 = vadd.f32 0.0, %v777
      %779 = vmatmul.bf16.gmra.mxu0 %v647
      %v780 = vpop.f32.mrf.mxu0
      %v781 = vadd.f32 0.0, %v780
      %v782 = vpop.f32.mrf.mxu0
      %v783 = vadd.f32 0.0, %v782
      %784 = vmatmul.bf16.gmra.mxu0 %v648
      %v785 = vpop.f32.mrf.mxu0
      %v786 = vadd.f32 0.0, %v785
      %v787 = vpop.f32.mrf.mxu0
      %v788 = vadd.f32 0.0, %v787
      %789 = vmatmul.bf16.gmra.mxu0 %v649
      %v790 = vpop.f32.mrf.mxu0
      %v791 = vadd.f32 0.0, %v790
      %v792 = vpop.f32.mrf.mxu0
      %v793 = vadd.f32 0.0, %v792
      %794 = vmatmul.bf16.gmra.mxu0 %v650
      %v795 = vpop.f32.mrf.mxu0
      %v796 = vadd.f32 0.0, %v795
      %v797 = vpop.f32.mrf.mxu0
      %v798 = vadd.f32 0.0, %v797
      %799 = vmatmul.bf16.gmra.mxu0 %v651
      %v800 = vpop.f32.mrf.mxu0
      %v801 = vadd.f32 0.0, %v800
      %v802 = vpop.f32.mrf.mxu0
      %v803 = vadd.f32 0.0, %v802
      %804 = vmatmul.bf16.gmra.mxu0 %v652
      %v805 = vpop.f32.mrf.mxu0
      %v806 = vadd.f32 0.0, %v805
      %v807 = vpop.f32.mrf.mxu0
      %v808 = vadd.f32 0.0, %v807
      %809 = vmatmul.bf16.gmra.mxu0 %v653
      %v810 = vpop.f32.mrf.mxu0
      %v811 = vadd.f32 0.0, %v810
      %v812 = vpop.f32.mrf.mxu0
      %v813 = vadd.f32 0.0, %v812
      %814 = vmatmul.bf16.gmra.mxu0 %v654
      %v815 = vpop.f32.mrf.mxu0
      %v816 = vadd.f32 0.0, %v815
      %v817 = vpop.f32.mrf.mxu0
      %v818 = vadd.f32 0.0, %v817
      %819 = vmatmul.bf16.gmra.mxu0 %v655
      %v820 = vpop.f32.mrf.mxu0
      %v821 = vadd.f32 0.0, %v820
      %v822 = vpop.f32.mrf.mxu0
      %v823 = vadd.f32 0.0, %v822
      %824 = vmatmul.bf16.gmra.mxu0 %v656
      %v825 = vpop.f32.mrf.mxu0
      %v826 = vadd.f32 0.0, %v825
      %v827 = vpop.f32.mrf.mxu0
      %v828 = vadd.f32 0.0, %v827
      %829 = vmatmul.bf16.gmra.mxu0 %v657
      %v830 = vpop.f32.mrf.mxu0
      %v831 = vadd.f32 0.0, %v830
      %v832 = vpop.f32.mrf.mxu0
      %v833 = vadd.f32 0.0, %v832
      %834 = vmatmul.bf16.gmra.mxu0 %v658
      %v835 = vpop.f32.mrf.mxu0
      %v836 = vadd.f32 0.0, %v835
      %v837 = vpop.f32.mrf.mxu0
      %v838 = vadd.f32 0.0, %v837
      %839 = vmatmul.bf16.gmra.mxu0 %v659
      %v840 = vpop.f32.mrf.mxu0
      %v841 = vadd.f32 0.0, %v840
      %v842 = vpop.f32.mrf.mxu0
      %v843 = vadd.f32 0.0, %v842
      %844 = vdwg.mxu0
      %845 = vmatpush.bf16.msra.mxu0 %v739
      %846 = vmatpush.bf16.msra.mxu0 %v737
      %847 = vmatpush.bf16.msra.mxu0 %v735
      %848 = vmatpush.bf16.msra.mxu0 %v733
      %849 = vmatpush.bf16.msra.mxu0 %v731
      %850 = vmatpush.bf16.msra.mxu0 %v729
      %851 = vmatpush.bf16.msra.mxu0 %v727
      %852 = vmatpush.bf16.msra.mxu0 %v725
      %853 = vmatmul.bf16.gmra.mxu0 %v644
      %v854 = vpop.f32.mrf.mxu0
      %v855 = vadd.f32 0.0, %v854
      %v856 = vpop.f32.mrf.mxu0
      %v857 = vadd.f32 0.0, %v856
      %858 = vmatmul.bf16.gmra.mxu0 %v645
      %v859 = vpop.f32.mrf.mxu0
      %v860 = vadd.f32 0.0, %v859
      %v861 = vpop.f32.mrf.mxu0
      %v862 = vadd.f32 0.0, %v861
      %863 = vmatmul.bf16.gmra.mxu0 %v646
      %v864 = vpop.f32.mrf.mxu0
      %v865 = vadd.f32 0.0, %v864
      %v866 = vpop.f32.mrf.mxu0
      %v867 = vadd.f32 0.0, %v866
      %868 = vmatmul.bf16.gmra.mxu0 %v647
      %v869 = vpop.f32.mrf.mxu0
      %v870 = vadd.f32 0.0, %v869
      %v871 = vpop.f32.mrf.mxu0
      %v872 = vadd.f32 0.0, %v871
      %873 = vmatmul.bf16.gmra.mxu0 %v648
      %v874 = vpop.f32.mrf.mxu0
      %v875 = vadd.f32 0.0, %v874
      %v876 = vpop.f32.mrf.mxu0
      %v877 = vadd.f32 0.0, %v876
      %878 = vmatmul.bf16.gmra.mxu0 %v649
      %v879 = vpop.f32.mrf.mxu0
      %v880 = vadd.f32 0.0, %v879
      %v881 = vpop.f32.mrf.mxu0
      %v882 = vadd.f32 0.0, %v881
      %883 = vmatmul.bf16.gmra.mxu0 %v650
      %v884 = vpop.f32.mrf.mxu0
      %v885 = vadd.f32 0.0, %v884
      %v886 = vpop.f32.mrf.mxu0
      %v887 = vadd.f32 0.0, %v886
      %888 = vmatmul.bf16.gmra.mxu0 %v651
      %v889 = vpop.f32.mrf.mxu0
      %v890 = vadd.f32 0.0, %v889
      %v891 = vpop.f32.mrf.mxu0
      %v892 = vadd.f32 0.0, %v891
      %893 = vmatmul.bf16.gmra.mxu0 %v652
      %v894 = vpop.f32.mrf.mxu0
      %v895 = vadd.f32 0.0, %v894
      %v896 = vpop.f32.mrf.mxu0
      %v897 = vadd.f32 0.0, %v896
      %898 = vmatmul.bf16.gmra.mxu0 %v653
      %v899 = vpop.f32.mrf.mxu0
      %v900 = vadd.f32 0.0, %v899
      %v901 = vpop.f32.mrf.mxu0
      %v902 = vadd.f32 0.0, %v901
      %903 = vmatmul.bf16.gmra.mxu0 %v654
      %v904 = vpop.f32.mrf.mxu0
      %v905 = vadd.f32 0.0, %v904
      %v906 = vpop.f32.mrf.mxu0
      %v907 = vadd.f32 0.0, %v906
      %908 = vmatmul.bf16.gmra.mxu0 %v655
      %v909 = vpop.f32.mrf.mxu0
      %v910 = vadd.f32 0.0, %v909
      %v911 = vpop.f32.mrf.mxu0
      %v912 = vadd.f32 0.0, %v911
      %913 = vmatmul.bf16.gmra.mxu0 %v656
      %v914 = vpop.f32.mrf.mxu0
      %v915 = vadd.f32 0.0, %v914
      %v916 = vpop.f32.mrf.mxu0
      %v917 = vadd.f32 0.0, %v916
      %918 = vmatmul.bf16.gmra.mxu0 %v657
      %v919 = vpop.f32.mrf.mxu0
      %v920 = vadd.f32 0.0, %v919
      %v921 = vpop.f32.mrf.mxu0
      %v922 = vadd.f32 0.0, %v921
      %923 = vmatmul.bf16.gmra.mxu0 %v658
      %v924 = vpop.f32.mrf.mxu0
      %v925 = vadd.f32 0.0, %v924
      %v926 = vpop.f32.mrf.mxu0
      %v927 = vadd.f32 0.0, %v926
      %928 = vmatmul.bf16.gmra.mxu0 %v659
      %v929 = vpop.f32.mrf.mxu0
      %v930 = vadd.f32 0.0, %v929
      %v931 = vpop.f32.mrf.mxu0
      %v932 = vadd.f32 0.0, %v931
      %933 = vdwg.mxu0
      %v966 = vunpack.c.l.b16 %v144
      %v967 = vunpack.c.l.b16 %v145
      %v968 = vunpack.c.l.b16 %v146
      %v969 = vunpack.c.l.b16 %v147
      %v970 = vunpack.c.l.b16 %v148
      %v971 = vunpack.c.l.b16 %v149
      %v972 = vunpack.c.l.b16 %v150
      %v973 = vunpack.c.l.b16 %v151
      %v974 = vunpack.c.l.b16 %v152
      %v975 = vunpack.c.l.b16 %v153
      %v976 = vunpack.c.l.b16 %v154
      %v977 = vunpack.c.l.b16 %v155
      %v978 = vunpack.c.l.b16 %v156
      %v979 = vunpack.c.l.b16 %v157
      %v980 = vunpack.c.l.b16 %v158
      %v981 = vunpack.c.l.b16 %v159
      %v982 = vunpack.c.l.b16 %v160
      %v983 = vunpack.c.l.b16 %v161
      %v984 = vunpack.c.l.b16 %v162
      %v985 = vunpack.c.l.b16 %v163
      %v986 = vunpack.c.l.b16 %v164
      %v987 = vunpack.c.l.b16 %v165
      %v988 = vunpack.c.l.b16 %v166
      %v989 = vunpack.c.l.b16 %v167
      %v990 = vunpack.c.l.b16 %v168
      %v991 = vunpack.c.l.b16 %v169
      %v992 = vunpack.c.l.b16 %v170
      %v993 = vunpack.c.l.b16 %v171
      %v994 = vunpack.c.l.b16 %v172
      %v995 = vunpack.c.l.b16 %v173
      %v996 = vunpack.c.l.b16 %v174
      %v997 = vunpack.c.l.b16 %v175
      %v998 = vpack.c.b16 %v967, %v966
      %v999 = vpack.c.b16 %v969, %v968
      %v1000 = vpack.c.b16 %v971, %v970
      %v1001 = vpack.c.b16 %v973, %v972
      %v1002 = vpack.c.b16 %v975, %v974
      %v1003 = vpack.c.b16 %v977, %v976
      %v1004 = vpack.c.b16 %v979, %v978
      %v1005 = vpack.c.b16 %v981, %v980
      %v1006 = vpack.c.b16 %v983, %v982
      %v1007 = vpack.c.b16 %v985, %v984
      %v1008 = vpack.c.b16 %v987, %v986
      %v1009 = vpack.c.b16 %v989, %v988
      %v1010 = vpack.c.b16 %v991, %v990
      %v1011 = vpack.c.b16 %v993, %v992
      %v1012 = vpack.c.b16 %v995, %v994
      %v1013 = vpack.c.b16 %v997, %v996
      %v1046 = vunpack.c.l.b16 %v176
      %v1047 = vunpack.c.h.b16 %v176
      %v1048 = vunpack.c.l.b16 %v177
      %v1049 = vunpack.c.h.b16 %v177
      %v1050 = vunpack.c.l.b16 %v178
      %v1051 = vunpack.c.h.b16 %v178
      %v1052 = vunpack.c.l.b16 %v179
      %v1053 = vunpack.c.h.b16 %v179
      %v1054 = vunpack.c.l.b16 %v180
      %v1055 = vunpack.c.h.b16 %v180
      %v1056 = vunpack.c.l.b16 %v181
      %v1057 = vunpack.c.h.b16 %v181
      %v1058 = vunpack.c.l.b16 %v182
      %v1059 = vunpack.c.h.b16 %v182
      %v1060 = vunpack.c.l.b16 %v183
      %v1061 = vunpack.c.h.b16 %v183
      %v1062 = vunpack.c.l.b16 %v184
      %v1063 = vunpack.c.h.b16 %v184
      %v1064 = vunpack.c.l.b16 %v185
      %v1065 = vunpack.c.h.b16 %v185
      %v1066 = vunpack.c.l.b16 %v186
      %v1067 = vunpack.c.h.b16 %v186
      %v1068 = vunpack.c.l.b16 %v187
      %v1069 = vunpack.c.h.b16 %v187
      %v1070 = vunpack.c.l.b16 %v188
      %v1071 = vunpack.c.h.b16 %v188
      %v1072 = vunpack.c.l.b16 %v189
      %v1073 = vunpack.c.h.b16 %v189
      %v1074 = vunpack.c.l.b16 %v190
      %v1075 = vunpack.c.h.b16 %v190
      %v1076 = vunpack.c.l.b16 %v191
      %v1077 = vunpack.c.h.b16 %v191
      %v1078 = vpack.c.b16 %v1048, %v1046
      %v1079 = vpack.c.b16 %v1049, %v1047
      %v1080 = vpack.c.b16 %v1052, %v1050
      %v1081 = vpack.c.b16 %v1053, %v1051
      %v1082 = vpack.c.b16 %v1056, %v1054
      %v1083 = vpack.c.b16 %v1057, %v1055
      %v1084 = vpack.c.b16 %v1060, %v1058
      %v1085 = vpack.c.b16 %v1061, %v1059
      %v1086 = vpack.c.b16 %v1064, %v1062
      %v1087 = vpack.c.b16 %v1065, %v1063
      %v1088 = vpack.c.b16 %v1068, %v1066
      %v1089 = vpack.c.b16 %v1069, %v1067
      %v1090 = vpack.c.b16 %v1072, %v1070
      %v1091 = vpack.c.b16 %v1073, %v1071
      %v1092 = vpack.c.b16 %v1076, %v1074
      %v1093 = vpack.c.b16 %v1077, %v1075
      %1110 = vmatpush.bf16.msra.mxu0 %v1092
      %1111 = vmatpush.bf16.msra.mxu0 %v1090
      %1112 = vmatpush.bf16.msra.mxu0 %v1088
      %1113 = vmatpush.bf16.msra.mxu0 %v1086
      %1114 = vmatpush.bf16.msra.mxu0 %v1084
      %1115 = vmatpush.bf16.msra.mxu0 %v1082
      %1116 = vmatpush.bf16.msra.mxu0 %v1080
      %1117 = vmatpush.bf16.msra.mxu0 %v1078
      %1118 = vmatmul.bf16.gmra.mxu0 %v998
      %v1119 = vpop.f32.mrf.mxu0
      %v1120 = vadd.f32 %v766, %v1119
      %v1121 = vpop.f32.mrf.mxu0
      %v1122 = vadd.f32 %v768, %v1121
      %1123 = vmatmul.bf16.gmra.mxu0 %v999
      %v1124 = vpop.f32.mrf.mxu0
      %v1125 = vadd.f32 %v771, %v1124
      %v1126 = vpop.f32.mrf.mxu0
      %v1127 = vadd.f32 %v773, %v1126
      %1128 = vmatmul.bf16.gmra.mxu0 %v1000
      %v1129 = vpop.f32.mrf.mxu0
      %v1130 = vadd.f32 %v776, %v1129
      %v1131 = vpop.f32.mrf.mxu0
      %v1132 = vadd.f32 %v778, %v1131
      %1133 = vmatmul.bf16.gmra.mxu0 %v1001
      %v1134 = vpop.f32.mrf.mxu0
      %v1135 = vadd.f32 %v781, %v1134
      %v1136 = vpop.f32.mrf.mxu0
      %v1137 = vadd.f32 %v783, %v1136
      %1138 = vmatmul.bf16.gmra.mxu0 %v1002
      %v1139 = vpop.f32.mrf.mxu0
      %v1140 = vadd.f32 %v786, %v1139
      %v1141 = vpop.f32.mrf.mxu0
      %v1142 = vadd.f32 %v788, %v1141
      %1143 = vmatmul.bf16.gmra.mxu0 %v1003
      %v1144 = vpop.f32.mrf.mxu0
      %v1145 = vadd.f32 %v791, %v1144
      %v1146 = vpop.f32.mrf.mxu0
      %v1147 = vadd.f32 %v793, %v1146
      %1148 = vmatmul.bf16.gmra.mxu0 %v1004
      %v1149 = vpop.f32.mrf.mxu0
      %v1150 = vadd.f32 %v796, %v1149
      %v1151 = vpop.f32.mrf.mxu0
      %v1152 = vadd.f32 %v798, %v1151
      %1153 = vmatmul.bf16.gmra.mxu0 %v1005
      %v1154 = vpop.f32.mrf.mxu0
      %v1155 = vadd.f32 %v801, %v1154
      %v1156 = vpop.f32.mrf.mxu0
      %v1157 = vadd.f32 %v803, %v1156
      %1158 = vmatmul.bf16.gmra.mxu0 %v1006
      %v1159 = vpop.f32.mrf.mxu0
      %v1160 = vadd.f32 %v806, %v1159
      %v1161 = vpop.f32.mrf.mxu0
      %v1162 = vadd.f32 %v808, %v1161
      %1163 = vmatmul.bf16.gmra.mxu0 %v1007
      %v1164 = vpop.f32.mrf.mxu0
      %v1165 = vadd.f32 %v811, %v1164
      %v1166 = vpop.f32.mrf.mxu0
      %v1167 = vadd.f32 %v813, %v1166
      %1168 = vmatmul.bf16.gmra.mxu0 %v1008
      %v1169 = vpop.f32.mrf.mxu0
      %v1170 = vadd.f32 %v816, %v1169
      %v1171 = vpop.f32.mrf.mxu0
      %v1172 = vadd.f32 %v818, %v1171
      %1173 = vmatmul.bf16.gmra.mxu0 %v1009
      %v1174 = vpop.f32.mrf.mxu0
      %v1175 = vadd.f32 %v821, %v1174
      %v1176 = vpop.f32.mrf.mxu0
      %v1177 = vadd.f32 %v823, %v1176
      %1178 = vmatmul.bf16.gmra.mxu0 %v1010
      %v1179 = vpop.f32.mrf.mxu0
      %v1180 = vadd.f32 %v826, %v1179
      %v1181 = vpop.f32.mrf.mxu0
      %v1182 = vadd.f32 %v828, %v1181
      %1183 = vmatmul.bf16.gmra.mxu0 %v1011
      %v1184 = vpop.f32.mrf.mxu0
      %v1185 = vadd.f32 %v831, %v1184
      %v1186 = vpop.f32.mrf.mxu0
      %v1187 = vadd.f32 %v833, %v1186
      %1188 = vmatmul.bf16.gmra.mxu0 %v1012
      %v1189 = vpop.f32.mrf.mxu0
      %v1190 = vadd.f32 %v836, %v1189
      %v1191 = vpop.f32.mrf.mxu0
      %v1192 = vadd.f32 %v838, %v1191
      %1193 = vmatmul.bf16.gmra.mxu0 %v1013
      %v1194 = vpop.f32.mrf.mxu0
      %v1195 = vadd.f32 %v841, %v1194
      %v1196 = vpop.f32.mrf.mxu0
      %v1197 = vadd.f32 %v843, %v1196
      %1198 = vdwg.mxu0
      %1199 = vmatpush.bf16.msra.mxu0 %v1093
      %1200 = vmatpush.bf16.msra.mxu0 %v1091
      %1201 = vmatpush.bf16.msra.mxu0 %v1089
      %1202 = vmatpush.bf16.msra.mxu0 %v1087
      %1203 = vmatpush.bf16.msra.mxu0 %v1085
      %1204 = vmatpush.bf16.msra.mxu0 %v1083
      %1205 = vmatpush.bf16.msra.mxu0 %v1081
      %1206 = vmatpush.bf16.msra.mxu0 %v1079
      %1207 = vmatmul.bf16.gmra.mxu0 %v998
      %v1208 = vpop.f32.mrf.mxu0
      %v1209 = vadd.f32 %v855, %v1208
      %v1210 = vpop.f32.mrf.mxu0
      %v1211 = vadd.f32 %v857, %v1210
      %1212 = vmatmul.bf16.gmra.mxu0 %v999
      %v1213 = vpop.f32.mrf.mxu0
      %v1214 = vadd.f32 %v860, %v1213
      %v1215 = vpop.f32.mrf.mxu0
      %v1216 = vadd.f32 %v862, %v1215
      %1217 = vmatmul.bf16.gmra.mxu0 %v1000
      %v1218 = vpop.f32.mrf.mxu0
      %v1219 = vadd.f32 %v865, %v1218
      %v1220 = vpop.f32.mrf.mxu0
      %v1221 = vadd.f32 %v867, %v1220
      %1222 = vmatmul.bf16.gmra.mxu0 %v1001
      %v1223 = vpop.f32.mrf.mxu0
      %v1224 = vadd.f32 %v870, %v1223
      %v1225 = vpop.f32.mrf.mxu0
      %v1226 = vadd.f32 %v872, %v1225
      %1227 = vmatmul.bf16.gmra.mxu0 %v1002
      %v1228 = vpop.f32.mrf.mxu0
      %v1229 = vadd.f32 %v875, %v1228
      %v1230 = vpop.f32.mrf.mxu0
      %v1231 = vadd.f32 %v877, %v1230
      %1232 = vmatmul.bf16.gmra.mxu0 %v1003
      %v1233 = vpop.f32.mrf.mxu0
      %v1234 = vadd.f32 %v880, %v1233
      %v1235 = vpop.f32.mrf.mxu0
      %v1236 = vadd.f32 %v882, %v1235
      %1237 = vmatmul.bf16.gmra.mxu0 %v1004
      %v1238 = vpop.f32.mrf.mxu0
      %v1239 = vadd.f32 %v885, %v1238
      %v1240 = vpop.f32.mrf.mxu0
      %v1241 = vadd.f32 %v887, %v1240
      %1242 = vmatmul.bf16.gmra.mxu0 %v1005
      %v1243 = vpop.f32.mrf.mxu0
      %v1244 = vadd.f32 %v890, %v1243
      %v1245 = vpop.f32.mrf.mxu0
      %v1246 = vadd.f32 %v892, %v1245
      %1247 = vmatmul.bf16.gmra.mxu0 %v1006
      %v1248 = vpop.f32.mrf.mxu0
      %v1249 = vadd.f32 %v895, %v1248
      %v1250 = vpop.f32.mrf.mxu0
      %v1251 = vadd.f32 %v897, %v1250
      %1252 = vmatmul.bf16.gmra.mxu0 %v1007
      %v1253 = vpop.f32.mrf.mxu0
      %v1254 = vadd.f32 %v900, %v1253
      %v1255 = vpop.f32.mrf.mxu0
      %v1256 = vadd.f32 %v902, %v1255
      %1257 = vmatmul.bf16.gmra.mxu0 %v1008
      %v1258 = vpop.f32.mrf.mxu0
      %v1259 = vadd.f32 %v905, %v1258
      %v1260 = vpop.f32.mrf.mxu0
      %v1261 = vadd.f32 %v907, %v1260
      %1262 = vmatmul.bf16.gmra.mxu0 %v1009
      %v1263 = vpop.f32.mrf.mxu0
      %v1264 = vadd.f32 %v910, %v1263
      %v1265 = vpop.f32.mrf.mxu0
      %v1266 = vadd.f32 %v912, %v1265
      %1267 = vmatmul.bf16.gmra.mxu0 %v1010
      %v1268 = vpop.f32.mrf.mxu0
      %v1269 = vadd.f32 %v915, %v1268
      %v1270 = vpop.f32.mrf.mxu0
      %v1271 = vadd.f32 %v917, %v1270
      %1272 = vmatmul.bf16.gmra.mxu0 %v1011
      %v1273 = vpop.f32.mrf.mxu0
      %v1274 = vadd.f32 %v920, %v1273
      %v1275 = vpop.f32.mrf.mxu0
      %v1276 = vadd.f32 %v922, %v1275
      %1277 = vmatmul.bf16.gmra.mxu0 %v1012
      %v1278 = vpop.f32.mrf.mxu0
      %v1279 = vadd.f32 %v925, %v1278
      %v1280 = vpop.f32.mrf.mxu0
      %v1281 = vadd.f32 %v927, %v1280
      %1282 = vmatmul.bf16.gmra.mxu0 %v1013
      %v1283 = vpop.f32.mrf.mxu0
      %v1284 = vadd.f32 %v930, %v1283
      %v1285 = vpop.f32.mrf.mxu0
      %v1286 = vadd.f32 %v932, %v1285
      %1287 = vdwg.mxu0
      %s1288 = scalar_lea.vmem %s138, 12
      %v1289 = vld [vmem:[%s1288] sm:$0xf]
      %v1290 = vld [vmem:[%s1288 + $0x4] sm:$0xf]
      %v1291 = vld [vmem:[%s1288 + $0xc] sm:$0xf]
      %v1292 = vld [vmem:[%s1288 + $0x10] sm:$0xf]
      %v1293 = vld [vmem:[%s1288 + $0x18] sm:$0xf]
      %v1294 = vld [vmem:[%s1288 + $0x1c] sm:$0xf]
      %v1295 = vld [vmem:[%s1288 + $0x24] sm:$0xf]
      %v1296 = vld [vmem:[%s1288 + $0x28] sm:$0xf]
      %v1297 = vld [vmem:[%s1288 + $0x30] sm:$0xf]
      %v1298 = vld [vmem:[%s1288 + $0x34] sm:$0xf]
      %v1299 = vld [vmem:[%s1288 + $0x3c] sm:$0xf]
      %v1300 = vld [vmem:[%s1288 + $0x40] sm:$0xf]
      %v1301 = vld [vmem:[%s1288 + $0x48] sm:$0xf]
      %v1302 = vld [vmem:[%s1288 + $0x4c] sm:$0xf]
      %v1303 = vld [vmem:[%s1288 + $0x54] sm:$0xf]
      %v1304 = vld [vmem:[%s1288 + $0x58] sm:$0xf]
      %v1305 = vld [vmem:[%s1288 + $0x60] sm:$0xf]
      %v1306 = vld [vmem:[%s1288 + $0x64] sm:$0xf]
      %v1307 = vld [vmem:[%s1288 + $0x6c] sm:$0xf]
      %v1308 = vld [vmem:[%s1288 + $0x70] sm:$0xf]
      %v1309 = vld [vmem:[%s1288 + $0x78] sm:$0xf]
      %v1310 = vld [vmem:[%s1288 + $0x7c] sm:$0xf]
      %v1311 = vld [vmem:[%s1288 + $0x84] sm:$0xf]
      %v1312 = vld [vmem:[%s1288 + $0x88] sm:$0xf]
      %v1313 = vld [vmem:[%s1288 + $0x90] sm:$0xf]
      %v1314 = vld [vmem:[%s1288 + $0x94] sm:$0xf]
      %v1315 = vld [vmem:[%s1288 + $0x9c] sm:$0xf]
      %v1316 = vld [vmem:[%s1288 + $0xa0] sm:$0xf]
      %v1317 = vld [vmem:[%s1288 + $0xa8] sm:$0xf]
      %v1318 = vld [vmem:[%s1288 + $0xac] sm:$0xf]
      %v1319 = vld [vmem:[%s1288 + $0xb4] sm:$0xf]
      %v1320 = vld [vmem:[%s1288 + $0xb8] sm:$0xf]
      %s1321 = scalar_lea.vmem %s1, 256
      %v1322 = vld [vmem:[%s1321] sm:$0xff]
      %v1323 = vld [vmem:[%s1321 + $0x8] sm:$0xff]
      %v1324 = vld [vmem:[%s1321 + $0x10] sm:$0xff]
      %v1325 = vld [vmem:[%s1321 + $0x18] sm:$0xff]
      %v1326 = vld [vmem:[%s1321 + $0x20] sm:$0xff]
      %v1327 = vld [vmem:[%s1321 + $0x28] sm:$0xff]
      %v1328 = vld [vmem:[%s1321 + $0x30] sm:$0xff]
      %v1329 = vld [vmem:[%s1321 + $0x38] sm:$0xff]
      %v1330 = vld [vmem:[%s1321 + $0x40] sm:$0xff]
      %v1331 = vld [vmem:[%s1321 + $0x48] sm:$0xff]
      %v1332 = vld [vmem:[%s1321 + $0x50] sm:$0xff]
      %v1333 = vld [vmem:[%s1321 + $0x58] sm:$0xff]
      %v1334 = vld [vmem:[%s1321 + $0x60] sm:$0xff]
      %v1335 = vld [vmem:[%s1321 + $0x68] sm:$0xff]
      %v1336 = vld [vmem:[%s1321 + $0x70] sm:$0xff]
      %v1337 = vld [vmem:[%s1321 + $0x78] sm:$0xff]
      %v1370 = vunpack.c.l.b16 %v1289
      %v1371 = vunpack.c.l.b16 %v1290
      %v1372 = vunpack.c.l.b16 %v1291
      %v1373 = vunpack.c.l.b16 %v1292
      %v1374 = vunpack.c.l.b16 %v1293
      %v1375 = vunpack.c.l.b16 %v1294
      %v1376 = vunpack.c.l.b16 %v1295
      %v1377 = vunpack.c.l.b16 %v1296
      %v1378 = vunpack.c.l.b16 %v1297
      %v1379 = vunpack.c.l.b16 %v1298
      %v1380 = vunpack.c.l.b16 %v1299
      %v1381 = vunpack.c.l.b16 %v1300
      %v1382 = vunpack.c.l.b16 %v1301
      %v1383 = vunpack.c.l.b16 %v1302
      %v1384 = vunpack.c.l.b16 %v1303
      %v1385 = vunpack.c.l.b16 %v1304
      %v1386 = vunpack.c.l.b16 %v1305
      %v1387 = vunpack.c.l.b16 %v1306
      %v1388 = vunpack.c.l.b16 %v1307
      %v1389 = vunpack.c.l.b16 %v1308
      %v1390 = vunpack.c.l.b16 %v1309
      %v1391 = vunpack.c.l.b16 %v1310
      %v1392 = vunpack.c.l.b16 %v1311
      %v1393 = vunpack.c.l.b16 %v1312
      %v1394 = vunpack.c.l.b16 %v1313
      %v1395 = vunpack.c.l.b16 %v1314
      %v1396 = vunpack.c.l.b16 %v1315
      %v1397 = vunpack.c.l.b16 %v1316
      %v1398 = vunpack.c.l.b16 %v1317
      %v1399 = vunpack.c.l.b16 %v1318
      %v1400 = vunpack.c.l.b16 %v1319
      %v1401 = vunpack.c.l.b16 %v1320
      %v1402 = vpack.c.b16 %v1371, %v1370
      %v1403 = vpack.c.b16 %v1373, %v1372
      %v1404 = vpack.c.b16 %v1375, %v1374
      %v1405 = vpack.c.b16 %v1377, %v1376
      %v1406 = vpack.c.b16 %v1379, %v1378
      %v1407 = vpack.c.b16 %v1381, %v1380
      %v1408 = vpack.c.b16 %v1383, %v1382
      %v1409 = vpack.c.b16 %v1385, %v1384
      %v1410 = vpack.c.b16 %v1387, %v1386
      %v1411 = vpack.c.b16 %v1389, %v1388
      %v1412 = vpack.c.b16 %v1391, %v1390
      %v1413 = vpack.c.b16 %v1393, %v1392
      %v1414 = vpack.c.b16 %v1395, %v1394
      %v1415 = vpack.c.b16 %v1397, %v1396
      %v1416 = vpack.c.b16 %v1399, %v1398
      %v1417 = vpack.c.b16 %v1401, %v1400
      %v1450 = vunpack.c.l.b16 %v1322
      %v1451 = vunpack.c.h.b16 %v1322
      %v1452 = vunpack.c.l.b16 %v1323
      %v1453 = vunpack.c.h.b16 %v1323
      %v1454 = vunpack.c.l.b16 %v1324
      %v1455 = vunpack.c.h.b16 %v1324
      %v1456 = vunpack.c.l.b16 %v1325
      %v1457 = vunpack.c.h.b16 %v1325
      %v1458 = vunpack.c.l.b16 %v1326
      %v1459 = vunpack.c.h.b16 %v1326
      %v1460 = vunpack.c.l.b16 %v1327
      %v1461 = vunpack.c.h.b16 %v1327
      %v1462 = vunpack.c.l.b16 %v1328
      %v1463 = vunpack.c.h.b16 %v1328
      %v1464 = vunpack.c.l.b16 %v1329
      %v1465 = vunpack.c.h.b16 %v1329
      %v1466 = vunpack.c.l.b16 %v1330
      %v1467 = vunpack.c.h.b16 %v1330
      %v1468 = vunpack.c.l.b16 %v1331
      %v1469 = vunpack.c.h.b16 %v1331
      %v1470 = vunpack.c.l.b16 %v1332
      %v1471 = vunpack.c.h.b16 %v1332
      %v1472 = vunpack.c.l.b16 %v1333
      %v1473 = vunpack.c.h.b16 %v1333
      %v1474 = vunpack.c.l.b16 %v1334
      %v1475 = vunpack.c.h.b16 %v1334
      %v1476 = vunpack.c.l.b16 %v1335
      %v1477 = vunpack.c.h.b16 %v1335
      %v1478 = vunpack.c.l.b16 %v1336
      %v1479 = vunpack.c.h.b16 %v1336
      %v1480 = vunpack.c.l.b16 %v1337
      %v1481 = vunpack.c.h.b16 %v1337
      %v1482 = vpack.c.b16 %v1452, %v1450
      %v1483 = vpack.c.b16 %v1453, %v1451
      %v1484 = vpack.c.b16 %v1456, %v1454
      %v1485 = vpack.c.b16 %v1457, %v1455
      %v1486 = vpack.c.b16 %v1460, %v1458
      %v1487 = vpack.c.b16 %v1461, %v1459
      %v1488 = vpack.c.b16 %v1464, %v1462
      %v1489 = vpack.c.b16 %v1465, %v1463
      %v1490 = vpack.c.b16 %v1468, %v1466
      %v1491 = vpack.c.b16 %v1469, %v1467
      %v1492 = vpack.c.b16 %v1472, %v1470
      %v1493 = vpack.c.b16 %v1473, %v1471
      %v1494 = vpack.c.b16 %v1476, %v1474
      %v1495 = vpack.c.b16 %v1477, %v1475
      %v1496 = vpack.c.b16 %v1480, %v1478
      %v1497 = vpack.c.b16 %v1481, %v1479
      %1514 = vmatpush.bf16.msra.mxu0 %v1496
      %1515 = vmatpush.bf16.msra.mxu0 %v1494
      %1516 = vmatpush.bf16.msra.mxu0 %v1492
      %1517 = vmatpush.bf16.msra.mxu0 %v1490
      %1518 = vmatpush.bf16.msra.mxu0 %v1488
      %1519 = vmatpush.bf16.msra.mxu0 %v1486
      %1520 = vmatpush.bf16.msra.mxu0 %v1484
      %1521 = vmatpush.bf16.msra.mxu0 %v1482
      %1522 = vmatmul.bf16.gmra.mxu0 %v1402
      %v1523 = vpop.f32.mrf.mxu0
      %v1524 = vadd.f32 0.0, %v1523
      %v1525 = vpop.f32.mrf.mxu0
      %v1526 = vadd.f32 0.0, %v1525
      %1527 = vmatmul.bf16.gmra.mxu0 %v1403
      %v1528 = vpop.f32.mrf.mxu0
      %v1529 = vadd.f32 0.0, %v1528
      %v1530 = vpop.f32.mrf.mxu0
      %v1531 = vadd.f32 0.0, %v1530
      %1532 = vmatmul.bf16.gmra.mxu0 %v1404
      %v1533 = vpop.f32.mrf.mxu0
      %v1534 = vadd.f32 0.0, %v1533
      %v1535 = vpop.f32.mrf.mxu0
      %v1536 = vadd.f32 0.0, %v1535
      %1537 = vmatmul.bf16.gmra.mxu0 %v1405
      %v1538 = vpop.f32.mrf.mxu0
      %v1539 = vadd.f32 0.0, %v1538
      %v1540 = vpop.f32.mrf.mxu0
      %v1541 = vadd.f32 0.0, %v1540
      %1542 = vmatmul.bf16.gmra.mxu0 %v1406
      %v1543 = vpop.f32.mrf.mxu0
      %v1544 = vadd.f32 0.0, %v1543
      %v1545 = vpop.f32.mrf.mxu0
      %v1546 = vadd.f32 0.0, %v1545
      %1547 = vmatmul.bf16.gmra.mxu0 %v1407
      %v1548 = vpop.f32.mrf.mxu0
      %v1549 = vadd.f32 0.0, %v1548
      %v1550 = vpop.f32.mrf.mxu0
      %v1551 = vadd.f32 0.0, %v1550
      %1552 = vmatmul.bf16.gmra.mxu0 %v1408
      %v1553 = vpop.f32.mrf.mxu0
      %v1554 = vadd.f32 0.0, %v1553
      %v1555 = vpop.f32.mrf.mxu0
      %v1556 = vadd.f32 0.0, %v1555
      %1557 = vmatmul.bf16.gmra.mxu0 %v1409
      %v1558 = vpop.f32.mrf.mxu0
      %v1559 = vadd.f32 0.0, %v1558
      %v1560 = vpop.f32.mrf.mxu0
      %v1561 = vadd.f32 0.0, %v1560
      %1562 = vmatmul.bf16.gmra.mxu0 %v1410
      %v1563 = vpop.f32.mrf.mxu0
      %v1564 = vadd.f32 0.0, %v1563
      %v1565 = vpop.f32.mrf.mxu0
      %v1566 = vadd.f32 0.0, %v1565
      %1567 = vmatmul.bf16.gmra.mxu0 %v1411
      %v1568 = vpop.f32.mrf.mxu0
      %v1569 = vadd.f32 0.0, %v1568
      %v1570 = vpop.f32.mrf.mxu0
      %v1571 = vadd.f32 0.0, %v1570
      %1572 = vmatmul.bf16.gmra.mxu0 %v1412
      %v1573 = vpop.f32.mrf.mxu0
      %v1574 = vadd.f32 0.0, %v1573
      %v1575 = vpop.f32.mrf.mxu0
      %v1576 = vadd.f32 0.0, %v1575
      %1577 = vmatmul.bf16.gmra.mxu0 %v1413
      %v1578 = vpop.f32.mrf.mxu0
      %v1579 = vadd.f32 0.0, %v1578
      %v1580 = vpop.f32.mrf.mxu0
      %v1581 = vadd.f32 0.0, %v1580
      %1582 = vmatmul.bf16.gmra.mxu0 %v1414
      %v1583 = vpop.f32.mrf.mxu0
      %v1584 = vadd.f32 0.0, %v1583
      %v1585 = vpop.f32.mrf.mxu0
      %v1586 = vadd.f32 0.0, %v1585
      %1587 = vmatmul.bf16.gmra.mxu0 %v1415
      %v1588 = vpop.f32.mrf.mxu0
      %v1589 = vadd.f32 0.0, %v1588
      %v1590 = vpop.f32.mrf.mxu0
      %v1591 = vadd.f32 0.0, %v1590
      %1592 = vmatmul.bf16.gmra.mxu0 %v1416
      %v1593 = vpop.f32.mrf.mxu0
      %v1594 = vadd.f32 0.0, %v1593
      %v1595 = vpop.f32.mrf.mxu0
      %v1596 = vadd.f32 0.0, %v1595
      %1597 = vmatmul.bf16.gmra.mxu0 %v1417
      %v1598 = vpop.f32.mrf.mxu0
      %v1599 = vadd.f32 0.0, %v1598
      %v1600 = vpop.f32.mrf.mxu0
      %v1601 = vadd.f32 0.0, %v1600
      %1602 = vdwg.mxu0
      %1603 = vmatpush.bf16.msra.mxu0 %v1497
      %1604 = vmatpush.bf16.msra.mxu0 %v1495
      %1605 = vmatpush.bf16.msra.mxu0 %v1493
      %1606 = vmatpush.bf16.msra.mxu0 %v1491
      %1607 = vmatpush.bf16.msra.mxu0 %v1489
      %1608 = vmatpush.bf16.msra.mxu0 %v1487
      %1609 = vmatpush.bf16.msra.mxu0 %v1485
      %1610 = vmatpush.bf16.msra.mxu0 %v1483
      %1611 = vmatmul.bf16.gmra.mxu0 %v1402
      %v1612 = vpop.f32.mrf.mxu0
      %v1613 = vadd.f32 0.0, %v1612
      %v1614 = vpop.f32.mrf.mxu0
      %v1615 = vadd.f32 0.0, %v1614
      %1616 = vmatmul.bf16.gmra.mxu0 %v1403
      %v1617 = vpop.f32.mrf.mxu0
      %v1618 = vadd.f32 0.0, %v1617
      %v1619 = vpop.f32.mrf.mxu0
      %v1620 = vadd.f32 0.0, %v1619
      %1621 = vmatmul.bf16.gmra.mxu0 %v1404
      %v1622 = vpop.f32.mrf.mxu0
      %v1623 = vadd.f32 0.0, %v1622
      %v1624 = vpop.f32.mrf.mxu0
      %v1625 = vadd.f32 0.0, %v1624
      %1626 = vmatmul.bf16.gmra.mxu0 %v1405
      %v1627 = vpop.f32.mrf.mxu0
      %v1628 = vadd.f32 0.0, %v1627
      %v1629 = vpop.f32.mrf.mxu0
      %v1630 = vadd.f32 0.0, %v1629
      %1631 = vmatmul.bf16.gmra.mxu0 %v1406
      %v1632 = vpop.f32.mrf.mxu0
      %v1633 = vadd.f32 0.0, %v1632
      %v1634 = vpop.f32.mrf.mxu0
      %v1635 = vadd.f32 0.0, %v1634
      %1636 = vmatmul.bf16.gmra.mxu0 %v1407
      %v1637 = vpop.f32.mrf.mxu0
      %v1638 = vadd.f32 0.0, %v1637
      %v1639 = vpop.f32.mrf.mxu0
      %v1640 = vadd.f32 0.0, %v1639
      %1641 = vmatmul.bf16.gmra.mxu0 %v1408
      %v1642 = vpop.f32.mrf.mxu0
      %v1643 = vadd.f32 0.0, %v1642
      %v1644 = vpop.f32.mrf.mxu0
      %v1645 = vadd.f32 0.0, %v1644
      %1646 = vmatmul.bf16.gmra.mxu0 %v1409
      %v1647 = vpop.f32.mrf.mxu0
      %v1648 = vadd.f32 0.0, %v1647
      %v1649 = vpop.f32.mrf.mxu0
      %v1650 = vadd.f32 0.0, %v1649
      %1651 = vmatmul.bf16.gmra.mxu0 %v1410
      %v1652 = vpop.f32.mrf.mxu0
      %v1653 = vadd.f32 0.0, %v1652
      %v1654 = vpop.f32.mrf.mxu0
      %v1655 = vadd.f32 0.0, %v1654
      %1656 = vmatmul.bf16.gmra.mxu0 %v1411
      %v1657 = vpop.f32.mrf.mxu0
      %v1658 = vadd.f32 0.0, %v1657
      %v1659 = vpop.f32.mrf.mxu0
      %v1660 = vadd.f32 0.0, %v1659
      %1661 = vmatmul.bf16.gmra.mxu0 %v1412
      %v1662 = vpop.f32.mrf.mxu0
      %v1663 = vadd.f32 0.0, %v1662
      %v1664 = vpop.f32.mrf.mxu0
      %v1665 = vadd.f32 0.0, %v1664
      %1666 = vmatmul.bf16.gmra.mxu0 %v1413
      %v1667 = vpop.f32.mrf.mxu0
      %v1668 = vadd.f32 0.0, %v1667
      %v1669 = vpop.f32.mrf.mxu0
      %v1670 = vadd.f32 0.0, %v1669
      %1671 = vmatmul.bf16.gmra.mxu0 %v1414
      %v1672 = vpop.f32.mrf.mxu0
      %v1673 = vadd.f32 0.0, %v1672
      %v1674 = vpop.f32.mrf.mxu0
      %v1675 = vadd.f32 0.0, %v1674
      %1676 = vmatmul.bf16.gmra.mxu0 %v1415
      %v1677 = vpop.f32.mrf.mxu0
      %v1678 = vadd.f32 0.0, %v1677
      %v1679 = vpop.f32.mrf.mxu0
      %v1680 = vadd.f32 0.0, %v1679
      %1681 = vmatmul.bf16.gmra.mxu0 %v1416
      %v1682 = vpop.f32.mrf.mxu0
      %v1683 = vadd.f32 0.0, %v1682
      %v1684 = vpop.f32.mrf.mxu0
      %v1685 = vadd.f32 0.0, %v1684
      %1686 = vmatmul.bf16.gmra.mxu0 %v1417
      %v1687 = vpop.f32.mrf.mxu0
      %v1688 = vadd.f32 0.0, %v1687
      %v1689 = vpop.f32.mrf.mxu0
      %v1690 = vadd.f32 0.0, %v1689
      %1691 = vdwg.mxu0
      %v1692 = vadd.f32 %v1120, %v1524
      %v1693 = vadd.f32 %v1209, %v1613
      %v1694 = vadd.f32 %v1122, %v1526
      %v1695 = vadd.f32 %v1211, %v1615
      %v1696 = vadd.f32 %v1125, %v1529
      %v1697 = vadd.f32 %v1214, %v1618
      %v1698 = vadd.f32 %v1127, %v1531
      %v1699 = vadd.f32 %v1216, %v1620
      %v1700 = vadd.f32 %v1130, %v1534
      %v1701 = vadd.f32 %v1219, %v1623
      %v1702 = vadd.f32 %v1132, %v1536
      %v1703 = vadd.f32 %v1221, %v1625
      %v1704 = vadd.f32 %v1135, %v1539
      %v1705 = vadd.f32 %v1224, %v1628
      %v1706 = vadd.f32 %v1137, %v1541
      %v1707 = vadd.f32 %v1226, %v1630
      %v1708 = vadd.f32 %v1140, %v1544
      %v1709 = vadd.f32 %v1229, %v1633
      %v1710 = vadd.f32 %v1142, %v1546
      %v1711 = vadd.f32 %v1231, %v1635
      %v1712 = vadd.f32 %v1145, %v1549
      %v1713 = vadd.f32 %v1234, %v1638
      %v1714 = vadd.f32 %v1147, %v1551
      %v1715 = vadd.f32 %v1236, %v1640
      %v1716 = vadd.f32 %v1150, %v1554
      %v1717 = vadd.f32 %v1239, %v1643
      %v1718 = vadd.f32 %v1152, %v1556
      %v1719 = vadd.f32 %v1241, %v1645
      %v1720 = vadd.f32 %v1155, %v1559
      %v1721 = vadd.f32 %v1244, %v1648
      %v1722 = vadd.f32 %v1157, %v1561
      %v1723 = vadd.f32 %v1246, %v1650
      %v1724 = vadd.f32 %v1160, %v1564
      %v1725 = vadd.f32 %v1249, %v1653
      %v1726 = vadd.f32 %v1162, %v1566
      %v1727 = vadd.f32 %v1251, %v1655
      %v1728 = vadd.f32 %v1165, %v1569
      %v1729 = vadd.f32 %v1254, %v1658
      %v1730 = vadd.f32 %v1167, %v1571
      %v1731 = vadd.f32 %v1256, %v1660
      %v1732 = vadd.f32 %v1170, %v1574
      %v1733 = vadd.f32 %v1259, %v1663
      %v1734 = vadd.f32 %v1172, %v1576
      %v1735 = vadd.f32 %v1261, %v1665
      %v1736 = vadd.f32 %v1175, %v1579
      %v1737 = vadd.f32 %v1264, %v1668
      %v1738 = vadd.f32 %v1177, %v1581
      %v1739 = vadd.f32 %v1266, %v1670
      %v1740 = vadd.f32 %v1180, %v1584
      %v1741 = vadd.f32 %v1269, %v1673
      %v1742 = vadd.f32 %v1182, %v1586
      %v1743 = vadd.f32 %v1271, %v1675
      %v1744 = vadd.f32 %v1185, %v1589
      %v1745 = vadd.f32 %v1274, %v1678
      %v1746 = vadd.f32 %v1187, %v1591
      %v1747 = vadd.f32 %v1276, %v1680
      %v1748 = vadd.f32 %v1190, %v1594
      %v1749 = vadd.f32 %v1279, %v1683
      %v1750 = vadd.f32 %v1192, %v1596
      %v1751 = vadd.f32 %v1281, %v1685
      %v1752 = vadd.f32 %v1195, %v1599
      %v1753 = vadd.f32 %v1284, %v1688
      %v1754 = vadd.f32 %v1197, %v1601
      %v1755 = vadd.f32 %v1286, %v1690
      %v1756 = vld [vmem:[%s1288] sm:$0xf]
      %v1757 = vld [vmem:[%s1288 + $0x4] sm:$0xf]
      %v1758 = vld [vmem:[%s1288 + $0x8] sm:$0x1]
      %v1759 = vld [vmem:[%s1288 + $0xc] sm:$0xf]
      %v1760 = vld [vmem:[%s1288 + $0x10] sm:$0xf]
      %v1761 = vld [vmem:[%s1288 + $0x14] sm:$0x1]
      %v1762 = vld [vmem:[%s1288 + $0x18] sm:$0xf]
      %v1763 = vld [vmem:[%s1288 + $0x1c] sm:$0xf]
      %v1764 = vld [vmem:[%s1288 + $0x20] sm:$0x1]
      %v1765 = vld [vmem:[%s1288 + $0x24] sm:$0xf]
      %v1766 = vld [vmem:[%s1288 + $0x28] sm:$0xf]
      %v1767 = vld [vmem:[%s1288 + $0x2c] sm:$0x1]
      %v1768 = vld [vmem:[%s1288 + $0x30] sm:$0xf]
      %v1769 = vld [vmem:[%s1288 + $0x34] sm:$0xf]
      %v1770 = vld [vmem:[%s1288 + $0x38] sm:$0x1]
      %v1771 = vld [vmem:[%s1288 + $0x3c] sm:$0xf]
      %v1772 = vld [vmem:[%s1288 + $0x40] sm:$0xf]
      %v1773 = vld [vmem:[%s1288 + $0x44] sm:$0x1]
      %v1774 = vld [vmem:[%s1288 + $0x48] sm:$0xf]
      %v1775 = vld [vmem:[%s1288 + $0x4c] sm:$0xf]
      %v1776 = vld [vmem:[%s1288 + $0x50] sm:$0x1]
      %v1777 = vld [vmem:[%s1288 + $0x54] sm:$0xf]
      %v1778 = vld [vmem:[%s1288 + $0x58] sm:$0xf]
      %v1779 = vld [vmem:[%s1288 + $0x5c] sm:$0x1]
      %v1780 = vld [vmem:[%s1288 + $0x60] sm:$0xf]
      %v1781 = vld [vmem:[%s1288 + $0x64] sm:$0xf]
      %v1782 = vld [vmem:[%s1288 + $0x68] sm:$0x1]
      %v1783 = vld [vmem:[%s1288 + $0x6c] sm:$0xf]
      %v1784 = vld [vmem:[%s1288 + $0x70] sm:$0xf]
      %v1785 = vld [vmem:[%s1288 + $0x74] sm:$0x1]
      %v1786 = vld [vmem:[%s1288 + $0x78] sm:$0xf]
      %v1787 = vld [vmem:[%s1288 + $0x7c] sm:$0xf]
      %v1788 = vld [vmem:[%s1288 + $0x80] sm:$0x1]
      %v1789 = vld [vmem:[%s1288 + $0x84] sm:$0xf]
      %v1790 = vld [vmem:[%s1288 + $0x88] sm:$0xf]
      %v1791 = vld [vmem:[%s1288 + $0x8c] sm:$0x1]
      %v1792 = vld [vmem:[%s1288 + $0x90] sm:$0xf]
      %v1793 = vld [vmem:[%s1288 + $0x94] sm:$0xf]
      %v1794 = vld [vmem:[%s1288 + $0x98] sm:$0x1]
      %v1795 = vld [vmem:[%s1288 + $0x9c] sm:$0xf]
      %v1796 = vld [vmem:[%s1288 + $0xa0] sm:$0xf]
      %v1797 = vld [vmem:[%s1288 + $0xa4] sm:$0x1]
      %v1798 = vld [vmem:[%s1288 + $0xa8] sm:$0xf]
      %v1799 = vld [vmem:[%s1288 + $0xac] sm:$0xf]
      %v1800 = vld [vmem:[%s1288 + $0xb0] sm:$0x1]
      %v1801 = vld [vmem:[%s1288 + $0xb4] sm:$0xf]
      %v1802 = vld [vmem:[%s1288 + $0xb8] sm:$0xf]
      %v1803 = vld [vmem:[%s1288 + $0xbc] sm:$0x1]
      %v1805 = vshrl.u32 %v1756, 16
      %v1807 = vrot.slane %v1805, 4
      %v1808 = vshll.u32 %v1756, 16
      %v1810 = vrot.slane %v1808, 5
      %v1811 = vor.u32 %v1807, %v1810
      %v1812 = vrot.slane %v1811, 4
      %v1814 = vshll.u32 %v1757, 16
      %v1816 = vrot.slane %v1814, 5
      %v1817 = vsel %vm210, %v1812, %v1816
      %v1818 = vshrl.u32 %v1757, 16
      %v1820 = vrot.slane %v1818, 4
      %v1821 = vor.u32 %v1820, %v1816
      %v1822 = vrot.slane %v1821, 4
      %v1824 = vshll.u32 %v1758, 16
      %v1826 = vrot.slane %v1824, 5
      %v1827 = vsel %vm210, %v1822, %v1826
      %v1829 = vshrl.u32 %v1759, 16
      %v1831 = vrot.slane %v1829, 4
      %v1832 = vshll.u32 %v1759, 16
      %v1834 = vrot.slane %v1832, 5
      %v1835 = vor.u32 %v1831, %v1834
      %v1836 = vrot.slane %v1835, 4
      %v1838 = vshll.u32 %v1760, 16
      %v1840 = vrot.slane %v1838, 5
      %v1841 = vsel %vm210, %v1836, %v1840
      %v1842 = vshrl.u32 %v1760, 16
      %v1844 = vrot.slane %v1842, 4
      %v1845 = vor.u32 %v1844, %v1840
      %v1846 = vrot.slane %v1845, 4
      %v1848 = vshll.u32 %v1761, 16
      %v1850 = vrot.slane %v1848, 5
      %v1851 = vsel %vm210, %v1846, %v1850
      %v1853 = vshrl.u32 %v1762, 16
      %v1855 = vrot.slane %v1853, 4
      %v1856 = vshll.u32 %v1762, 16
      %v1858 = vrot.slane %v1856, 5
      %v1859 = vor.u32 %v1855, %v1858
      %v1860 = vrot.slane %v1859, 4
      %v1862 = vshll.u32 %v1763, 16
      %v1864 = vrot.slane %v1862, 5
      %v1865 = vsel %vm210, %v1860, %v1864
      %v1866 = vshrl.u32 %v1763, 16
      %v1868 = vrot.slane %v1866, 4
      %v1869 = vor.u32 %v1868, %v1864
      %v1870 = vrot.slane %v1869, 4
      %v1872 = vshll.u32 %v1764, 16
      %v1874 = vrot.slane %v1872, 5
      %v1875 = vsel %vm210, %v1870, %v1874
      %v1877 = vshrl.u32 %v1765, 16
      %v1879 = vrot.slane %v1877, 4
      %v1880 = vshll.u32 %v1765, 16
      %v1882 = vrot.slane %v1880, 5
      %v1883 = vor.u32 %v1879, %v1882
      %v1884 = vrot.slane %v1883, 4
      %v1886 = vshll.u32 %v1766, 16
      %v1888 = vrot.slane %v1886, 5
      %v1889 = vsel %vm210, %v1884, %v1888
      %v1890 = vshrl.u32 %v1766, 16
      %v1892 = vrot.slane %v1890, 4
      %v1893 = vor.u32 %v1892, %v1888
      %v1894 = vrot.slane %v1893, 4
      %v1896 = vshll.u32 %v1767, 16
      %v1898 = vrot.slane %v1896, 5
      %v1899 = vsel %vm210, %v1894, %v1898
      %v1901 = vshrl.u32 %v1768, 16
      %v1903 = vrot.slane %v1901, 4
      %v1904 = vshll.u32 %v1768, 16
      %v1906 = vrot.slane %v1904, 5
      %v1907 = vor.u32 %v1903, %v1906
      %v1908 = vrot.slane %v1907, 4
      %v1910 = vshll.u32 %v1769, 16
      %v1912 = vrot.slane %v1910, 5
      %v1913 = vsel %vm210, %v1908, %v1912
      %v1914 = vshrl.u32 %v1769, 16
      %v1916 = vrot.slane %v1914, 4
      %v1917 = vor.u32 %v1916, %v1912
      %v1918 = vrot.slane %v1917, 4
      %v1920 = vshll.u32 %v1770, 16
      %v1922 = vrot.slane %v1920, 5
      %v1923 = vsel %vm210, %v1918, %v1922
      %v1925 = vshrl.u32 %v1771, 16
      %v1927 = vrot.slane %v1925, 4
      %v1928 = vshll.u32 %v1771, 16
      %v1930 = vrot.slane %v1928, 5
      %v1931 = vor.u32 %v1927, %v1930
      %v1932 = vrot.slane %v1931, 4
      %v1934 = vshll.u32 %v1772, 16
      %v1936 = vrot.slane %v1934, 5
      %v1937 = vsel %vm210, %v1932, %v1936
      %v1938 = vshrl.u32 %v1772, 16
      %v1940 = vrot.slane %v1938, 4
      %v1941 = vor.u32 %v1940, %v1936
      %v1942 = vrot.slane %v1941, 4
      %v1944 = vshll.u32 %v1773, 16
      %v1946 = vrot.slane %v1944, 5
      %v1947 = vsel %vm210, %v1942, %v1946
      %v1949 = vshrl.u32 %v1774, 16
      %v1951 = vrot.slane %v1949, 4
      %v1952 = vshll.u32 %v1774, 16
      %v1954 = vrot.slane %v1952, 5
      %v1955 = vor.u32 %v1951, %v1954
      %v1956 = vrot.slane %v1955, 4
      %v1958 = vshll.u32 %v1775, 16
      %v1960 = vrot.slane %v1958, 5
      %v1961 = vsel %vm210, %v1956, %v1960
      %v1962 = vshrl.u32 %v1775, 16
      %v1964 = vrot.slane %v1962, 4
      %v1965 = vor.u32 %v1964, %v1960
      %v1966 = vrot.slane %v1965, 4
      %v1968 = vshll.u32 %v1776, 16
      %v1970 = vrot.slane %v1968, 5
      %v1971 = vsel %vm210, %v1966, %v1970
      %v1973 = vshrl.u32 %v1777, 16
      %v1975 = vrot.slane %v1973, 4
      %v1976 = vshll.u32 %v1777, 16
      %v1978 = vrot.slane %v1976, 5
      %v1979 = vor.u32 %v1975, %v1978
      %v1980 = vrot.slane %v1979, 4
      %v1982 = vshll.u32 %v1778, 16
      %v1984 = vrot.slane %v1982, 5
      %v1985 = vsel %vm210, %v1980, %v1984
      %v1986 = vshrl.u32 %v1778, 16
      %v1988 = vrot.slane %v1986, 4
      %v1989 = vor.u32 %v1988, %v1984
      %v1990 = vrot.slane %v1989, 4
      %v1992 = vshll.u32 %v1779, 16
      %v1994 = vrot.slane %v1992, 5
      %v1995 = vsel %vm210, %v1990, %v1994
      %v1997 = vshrl.u32 %v1780, 16
      %v1999 = vrot.slane %v1997, 4
      %v2000 = vshll.u32 %v1780, 16
      %v2002 = vrot.slane %v2000, 5
      %v2003 = vor.u32 %v1999, %v2002
      %v2004 = vrot.slane %v2003, 4
      %v2006 = vshll.u32 %v1781, 16
      %v2008 = vrot.slane %v2006, 5
      %v2009 = vsel %vm210, %v2004, %v2008
      %v2010 = vshrl.u32 %v1781, 16
      %v2012 = vrot.slane %v2010, 4
      %v2013 = vor.u32 %v2012, %v2008
      %v2014 = vrot.slane %v2013, 4
      %v2016 = vshll.u32 %v1782, 16
      %v2018 = vrot.slane %v2016, 5
      %v2019 = vsel %vm210, %v2014, %v2018
      %v2021 = vshrl.u32 %v1783, 16
      %v2023 = vrot.slane %v2021, 4
      %v2024 = vshll.u32 %v1783, 16
      %v2026 = vrot.slane %v2024, 5
      %v2027 = vor.u32 %v2023, %v2026
      %v2028 = vrot.slane %v2027, 4
      %v2030 = vshll.u32 %v1784, 16
      %v2032 = vrot.slane %v2030, 5
      %v2033 = vsel %vm210, %v2028, %v2032
      %v2034 = vshrl.u32 %v1784, 16
      %v2036 = vrot.slane %v2034, 4
      %v2037 = vor.u32 %v2036, %v2032
      %v2038 = vrot.slane %v2037, 4
      %v2040 = vshll.u32 %v1785, 16
      %v2042 = vrot.slane %v2040, 5
      %v2043 = vsel %vm210, %v2038, %v2042
      %v2045 = vshrl.u32 %v1786, 16
      %v2047 = vrot.slane %v2045, 4
      %v2048 = vshll.u32 %v1786, 16
      %v2050 = vrot.slane %v2048, 5
      %v2051 = vor.u32 %v2047, %v2050
      %v2052 = vrot.slane %v2051, 4
      %v2054 = vshll.u32 %v1787, 16
      %v2056 = vrot.slane %v2054, 5
      %v2057 = vsel %vm210, %v2052, %v2056
      %v2058 = vshrl.u32 %v1787, 16
      %v2060 = vrot.slane %v2058, 4
      %v2061 = vor.u32 %v2060, %v2056
      %v2062 = vrot.slane %v2061, 4
      %v2064 = vshll.u32 %v1788, 16
      %v2066 = vrot.slane %v2064, 5
      %v2067 = vsel %vm210, %v2062, %v2066
      %v2069 = vshrl.u32 %v1789, 16
      %v2071 = vrot.slane %v2069, 4
      %v2072 = vshll.u32 %v1789, 16
      %v2074 = vrot.slane %v2072, 5
      %v2075 = vor.u32 %v2071, %v2074
      %v2076 = vrot.slane %v2075, 4
      %v2078 = vshll.u32 %v1790, 16
      %v2080 = vrot.slane %v2078, 5
      %v2081 = vsel %vm210, %v2076, %v2080
      %v2082 = vshrl.u32 %v1790, 16
      %v2084 = vrot.slane %v2082, 4
      %v2085 = vor.u32 %v2084, %v2080
      %v2086 = vrot.slane %v2085, 4
      %v2088 = vshll.u32 %v1791, 16
      %v2090 = vrot.slane %v2088, 5
      %v2091 = vsel %vm210, %v2086, %v2090
      %v2093 = vshrl.u32 %v1792, 16
      %v2095 = vrot.slane %v2093, 4
      %v2096 = vshll.u32 %v1792, 16
      %v2098 = vrot.slane %v2096, 5
      %v2099 = vor.u32 %v2095, %v2098
      %v2100 = vrot.slane %v2099, 4
      %v2102 = vshll.u32 %v1793, 16
      %v2104 = vrot.slane %v2102, 5
      %v2105 = vsel %vm210, %v2100, %v2104
      %v2106 = vshrl.u32 %v1793, 16
      %v2108 = vrot.slane %v2106, 4
      %v2109 = vor.u32 %v2108, %v2104
      %v2110 = vrot.slane %v2109, 4
      %v2112 = vshll.u32 %v1794, 16
      %v2114 = vrot.slane %v2112, 5
      %v2115 = vsel %vm210, %v2110, %v2114
      %v2117 = vshrl.u32 %v1795, 16
      %v2119 = vrot.slane %v2117, 4
      %v2120 = vshll.u32 %v1795, 16
      %v2122 = vrot.slane %v2120, 5
      %v2123 = vor.u32 %v2119, %v2122
      %v2124 = vrot.slane %v2123, 4
      %v2126 = vshll.u32 %v1796, 16
      %v2128 = vrot.slane %v2126, 5
      %v2129 = vsel %vm210, %v2124, %v2128
      %v2130 = vshrl.u32 %v1796, 16
      %v2132 = vrot.slane %v2130, 4
      %v2133 = vor.u32 %v2132, %v2128
      %v2134 = vrot.slane %v2133, 4
      %v2136 = vshll.u32 %v1797, 16
      %v2138 = vrot.slane %v2136, 5
      %v2139 = vsel %vm210, %v2134, %v2138
      %v2141 = vshrl.u32 %v1798, 16
      %v2143 = vrot.slane %v2141, 4
      %v2144 = vshll.u32 %v1798, 16
      %v2146 = vrot.slane %v2144, 5
      %v2147 = vor.u32 %v2143, %v2146
      %v2148 = vrot.slane %v2147, 4
      %v2150 = vshll.u32 %v1799, 16
      %v2152 = vrot.slane %v2150, 5
      %v2153 = vsel %vm210, %v2148, %v2152
      %v2154 = vshrl.u32 %v1799, 16
      %v2156 = vrot.slane %v2154, 4
      %v2157 = vor.u32 %v2156, %v2152
      %v2158 = vrot.slane %v2157, 4
      %v2160 = vshll.u32 %v1800, 16
      %v2162 = vrot.slane %v2160, 5
      %v2163 = vsel %vm210, %v2158, %v2162
      %v2165 = vshrl.u32 %v1801, 16
      %v2167 = vrot.slane %v2165, 4
      %v2168 = vshll.u32 %v1801, 16
      %v2170 = vrot.slane %v2168, 5
      %v2171 = vor.u32 %v2167, %v2170
      %v2172 = vrot.slane %v2171, 4
      %v2174 = vshll.u32 %v1802, 16
      %v2176 = vrot.slane %v2174, 5
      %v2177 = vsel %vm210, %v2172, %v2176
      %v2178 = vshrl.u32 %v1802, 16
      %v2180 = vrot.slane %v2178, 4
      %v2181 = vor.u32 %v2180, %v2176
      %v2182 = vrot.slane %v2181, 4
      %v2184 = vshll.u32 %v1803, 16
      %v2186 = vrot.slane %v2184, 5
      %v2187 = vsel %vm210, %v2182, %v2186
      %s2188 = scalar_lea.vmem %s1, 384
      %v2189 = vld [vmem:[%s2188] sm:$0xff]
      %v2190 = vld [vmem:[%s2188 + $0x8] sm:$0xff]
      %v2191 = vld [vmem:[%s2188 + $0x10] sm:$0xff]
      %v2192 = vld [vmem:[%s2188 + $0x18] sm:$0xff]
      %v2193 = vld [vmem:[%s2188 + $0x20] sm:$0xff]
      %v2194 = vld [vmem:[%s2188 + $0x28] sm:$0xff]
      %v2195 = vld [vmem:[%s2188 + $0x30] sm:$0xff]
      %v2196 = vld [vmem:[%s2188 + $0x38] sm:$0xff]
      %v2197 = vld [vmem:[%s2188 + $0x40] sm:$0xff]
      %v2198 = vld [vmem:[%s2188 + $0x48] sm:$0xff]
      %v2199 = vld [vmem:[%s2188 + $0x50] sm:$0xff]
      %v2200 = vld [vmem:[%s2188 + $0x58] sm:$0xff]
      %v2201 = vld [vmem:[%s2188 + $0x60] sm:$0xff]
      %v2202 = vld [vmem:[%s2188 + $0x68] sm:$0xff]
      %v2203 = vld [vmem:[%s2188 + $0x70] sm:$0xff]
      %v2204 = vld [vmem:[%s2188 + $0x78] sm:$0xff]
      %v2205 = vunpack.c.l.b16 %v1817
      %v2206 = vunpack.c.l.b16 %v1827
      %v2207 = vunpack.c.l.b16 %v1841
      %v2208 = vunpack.c.l.b16 %v1851
      %v2209 = vunpack.c.l.b16 %v1865
      %v2210 = vunpack.c.l.b16 %v1875
      %v2211 = vunpack.c.l.b16 %v1889
      %v2212 = vunpack.c.l.b16 %v1899
      %v2213 = vunpack.c.l.b16 %v1913
      %v2214 = vunpack.c.l.b16 %v1923
      %v2215 = vunpack.c.l.b16 %v1937
      %v2216 = vunpack.c.l.b16 %v1947
      %v2217 = vunpack.c.l.b16 %v1961
      %v2218 = vunpack.c.l.b16 %v1971
      %v2219 = vunpack.c.l.b16 %v1985
      %v2220 = vunpack.c.l.b16 %v1995
      %v2221 = vunpack.c.l.b16 %v2009
      %v2222 = vunpack.c.l.b16 %v2019
      %v2223 = vunpack.c.l.b16 %v2033
      %v2224 = vunpack.c.l.b16 %v2043
      %v2225 = vunpack.c.l.b16 %v2057
      %v2226 = vunpack.c.l.b16 %v2067
      %v2227 = vunpack.c.l.b16 %v2081
      %v2228 = vunpack.c.l.b16 %v2091
      %v2229 = vunpack.c.l.b16 %v2105
      %v2230 = vunpack.c.l.b16 %v2115
      %v2231 = vunpack.c.l.b16 %v2129
      %v2232 = vunpack.c.l.b16 %v2139
      %v2233 = vunpack.c.l.b16 %v2153
      %v2234 = vunpack.c.l.b16 %v2163
      %v2235 = vunpack.c.l.b16 %v2177
      %v2236 = vunpack.c.l.b16 %v2187
      %v2237 = vpack.c.b16 %v2206, %v2205
      %v2238 = vpack.c.b16 %v2208, %v2207
      %v2239 = vpack.c.b16 %v2210, %v2209
      %v2240 = vpack.c.b16 %v2212, %v2211
      %v2241 = vpack.c.b16 %v2214, %v2213
      %v2242 = vpack.c.b16 %v2216, %v2215
      %v2243 = vpack.c.b16 %v2218, %v2217
      %v2244 = vpack.c.b16 %v2220, %v2219
      %v2245 = vpack.c.b16 %v2222, %v2221
      %v2246 = vpack.c.b16 %v2224, %v2223
      %v2247 = vpack.c.b16 %v2226, %v2225
      %v2248 = vpack.c.b16 %v2228, %v2227
      %v2249 = vpack.c.b16 %v2230, %v2229
      %v2250 = vpack.c.b16 %v2232, %v2231
      %v2251 = vpack.c.b16 %v2234, %v2233
      %v2252 = vpack.c.b16 %v2236, %v2235
      %v2285 = vunpack.c.l.b16 %v2189
      %v2286 = vunpack.c.h.b16 %v2189
      %v2287 = vunpack.c.l.b16 %v2190
      %v2288 = vunpack.c.h.b16 %v2190
      %v2289 = vunpack.c.l.b16 %v2191
      %v2290 = vunpack.c.h.b16 %v2191
      %v2291 = vunpack.c.l.b16 %v2192
      %v2292 = vunpack.c.h.b16 %v2192
      %v2293 = vunpack.c.l.b16 %v2193
      %v2294 = vunpack.c.h.b16 %v2193
      %v2295 = vunpack.c.l.b16 %v2194
      %v2296 = vunpack.c.h.b16 %v2194
      %v2297 = vunpack.c.l.b16 %v2195
      %v2298 = vunpack.c.h.b16 %v2195
      %v2299 = vunpack.c.l.b16 %v2196
      %v2300 = vunpack.c.h.b16 %v2196
      %v2301 = vunpack.c.l.b16 %v2197
      %v2302 = vunpack.c.h.b16 %v2197
      %v2303 = vunpack.c.l.b16 %v2198
      %v2304 = vunpack.c.h.b16 %v2198
      %v2305 = vunpack.c.l.b16 %v2199
      %v2306 = vunpack.c.h.b16 %v2199
      %v2307 = vunpack.c.l.b16 %v2200
      %v2308 = vunpack.c.h.b16 %v2200
      %v2309 = vunpack.c.l.b16 %v2201
      %v2310 = vunpack.c.h.b16 %v2201
      %v2311 = vunpack.c.l.b16 %v2202
      %v2312 = vunpack.c.h.b16 %v2202
      %v2313 = vunpack.c.l.b16 %v2203
      %v2314 = vunpack.c.h.b16 %v2203
      %v2315 = vunpack.c.l.b16 %v2204
      %v2316 = vunpack.c.h.b16 %v2204
      %v2317 = vpack.c.b16 %v2287, %v2285
      %v2318 = vpack.c.b16 %v2288, %v2286
      %v2319 = vpack.c.b16 %v2291, %v2289
      %v2320 = vpack.c.b16 %v2292, %v2290
      %v2321 = vpack.c.b16 %v2295, %v2293
      %v2322 = vpack.c.b16 %v2296, %v2294
      %v2323 = vpack.c.b16 %v2299, %v2297
      %v2324 = vpack.c.b16 %v2300, %v2298
      %v2325 = vpack.c.b16 %v2303, %v2301
      %v2326 = vpack.c.b16 %v2304, %v2302
      %v2327 = vpack.c.b16 %v2307, %v2305
      %v2328 = vpack.c.b16 %v2308, %v2306
      %v2329 = vpack.c.b16 %v2311, %v2309
      %v2330 = vpack.c.b16 %v2312, %v2310
      %v2331 = vpack.c.b16 %v2315, %v2313
      %v2332 = vpack.c.b16 %v2316, %v2314
      %2349 = vmatpush.bf16.msra.mxu0 %v2331
      %2350 = vmatpush.bf16.msra.mxu0 %v2329
      %2351 = vmatpush.bf16.msra.mxu0 %v2327
      %2352 = vmatpush.bf16.msra.mxu0 %v2325
      %2353 = vmatpush.bf16.msra.mxu0 %v2323
      %2354 = vmatpush.bf16.msra.mxu0 %v2321
      %2355 = vmatpush.bf16.msra.mxu0 %v2319
      %2356 = vmatpush.bf16.msra.mxu0 %v2317
      %2357 = vmatmul.bf16.gmra.mxu0 %v2237
      %v2358 = vpop.f32.mrf.mxu0
      %v2359 = vadd.f32 0.0, %v2358
      %v2360 = vpop.f32.mrf.mxu0
      %v2361 = vadd.f32 0.0, %v2360
      %2362 = vmatmul.bf16.gmra.mxu0 %v2238
      %v2363 = vpop.f32.mrf.mxu0
      %v2364 = vadd.f32 0.0, %v2363
      %v2365 = vpop.f32.mrf.mxu0
      %v2366 = vadd.f32 0.0, %v2365
      %2367 = vmatmul.bf16.gmra.mxu0 %v2239
      %v2368 = vpop.f32.mrf.mxu0
      %v2369 = vadd.f32 0.0, %v2368
      %v2370 = vpop.f32.mrf.mxu0
      %v2371 = vadd.f32 0.0, %v2370
      %2372 = vmatmul.bf16.gmra.mxu0 %v2240
      %v2373 = vpop.f32.mrf.mxu0
      %v2374 = vadd.f32 0.0, %v2373
      %v2375 = vpop.f32.mrf.mxu0
      %v2376 = vadd.f32 0.0, %v2375
      %2377 = vmatmul.bf16.gmra.mxu0 %v2241
      %v2378 = vpop.f32.mrf.mxu0
      %v2379 = vadd.f32 0.0, %v2378
      %v2380 = vpop.f32.mrf.mxu0
      %v2381 = vadd.f32 0.0, %v2380
      %2382 = vmatmul.bf16.gmra.mxu0 %v2242
      %v2383 = vpop.f32.mrf.mxu0
      %v2384 = vadd.f32 0.0, %v2383
      %v2385 = vpop.f32.mrf.mxu0
      %v2386 = vadd.f32 0.0, %v2385
      %2387 = vmatmul.bf16.gmra.mxu0 %v2243
      %v2388 = vpop.f32.mrf.mxu0
      %v2389 = vadd.f32 0.0, %v2388
      %v2390 = vpop.f32.mrf.mxu0
      %v2391 = vadd.f32 0.0, %v2390
      %2392 = vmatmul.bf16.gmra.mxu0 %v2244
      %v2393 = vpop.f32.mrf.mxu0
      %v2394 = vadd.f32 0.0, %v2393
      %v2395 = vpop.f32.mrf.mxu0
      %v2396 = vadd.f32 0.0, %v2395
      %2397 = vmatmul.bf16.gmra.mxu0 %v2245
      %v2398 = vpop.f32.mrf.mxu0
      %v2399 = vadd.f32 0.0, %v2398
      %v2400 = vpop.f32.mrf.mxu0
      %v2401 = vadd.f32 0.0, %v2400
      %2402 = vmatmul.bf16.gmra.mxu0 %v2246
      %v2403 = vpop.f32.mrf.mxu0
      %v2404 = vadd.f32 0.0, %v2403
      %v2405 = vpop.f32.mrf.mxu0
      %v2406 = vadd.f32 0.0, %v2405
      %2407 = vmatmul.bf16.gmra.mxu0 %v2247
      %v2408 = vpop.f32.mrf.mxu0
      %v2409 = vadd.f32 0.0, %v2408
      %v2410 = vpop.f32.mrf.mxu0
      %v2411 = vadd.f32 0.0, %v2410
      %2412 = vmatmul.bf16.gmra.mxu0 %v2248
      %v2413 = vpop.f32.mrf.mxu0
      %v2414 = vadd.f32 0.0, %v2413
      %v2415 = vpop.f32.mrf.mxu0
      %v2416 = vadd.f32 0.0, %v2415
      %2417 = vmatmul.bf16.gmra.mxu0 %v2249
      %v2418 = vpop.f32.mrf.mxu0
      %v2419 = vadd.f32 0.0, %v2418
      %v2420 = vpop.f32.mrf.mxu0
      %v2421 = vadd.f32 0.0, %v2420
      %2422 = vmatmul.bf16.gmra.mxu0 %v2250
      %v2423 = vpop.f32.mrf.mxu0
      %v2424 = vadd.f32 0.0, %v2423
      %v2425 = vpop.f32.mrf.mxu0
      %v2426 = vadd.f32 0.0, %v2425
      %2427 = vmatmul.bf16.gmra.mxu0 %v2251
      %v2428 = vpop.f32.mrf.mxu0
      %v2429 = vadd.f32 0.0, %v2428
      %v2430 = vpop.f32.mrf.mxu0
      %v2431 = vadd.f32 0.0, %v2430
      %2432 = vmatmul.bf16.gmra.mxu0 %v2252
      %v2433 = vpop.f32.mrf.mxu0
      %v2434 = vadd.f32 0.0, %v2433
      %v2435 = vpop.f32.mrf.mxu0
      %v2436 = vadd.f32 0.0, %v2435
      %2437 = vdwg.mxu0
      %2438 = vmatpush.bf16.msra.mxu0 %v2332
      %2439 = vmatpush.bf16.msra.mxu0 %v2330
      %2440 = vmatpush.bf16.msra.mxu0 %v2328
      %2441 = vmatpush.bf16.msra.mxu0 %v2326
      %2442 = vmatpush.bf16.msra.mxu0 %v2324
      %2443 = vmatpush.bf16.msra.mxu0 %v2322
      %2444 = vmatpush.bf16.msra.mxu0 %v2320
      %2445 = vmatpush.bf16.msra.mxu0 %v2318
      %2446 = vmatmul.bf16.gmra.mxu0 %v2237
      %v2447 = vpop.f32.mrf.mxu0
      %v2448 = vadd.f32 0.0, %v2447
      %v2449 = vpop.f32.mrf.mxu0
      %v2450 = vadd.f32 0.0, %v2449
      %2451 = vmatmul.bf16.gmra.mxu0 %v2238
      %v2452 = vpop.f32.mrf.mxu0
      %v2453 = vadd.f32 0.0, %v2452
      %v2454 = vpop.f32.mrf.mxu0
      %v2455 = vadd.f32 0.0, %v2454
      %2456 = vmatmul.bf16.gmra.mxu0 %v2239
      %v2457 = vpop.f32.mrf.mxu0
      %v2458 = vadd.f32 0.0, %v2457
      %v2459 = vpop.f32.mrf.mxu0
      %v2460 = vadd.f32 0.0, %v2459
      %2461 = vmatmul.bf16.gmra.mxu0 %v2240
      %v2462 = vpop.f32.mrf.mxu0
      %v2463 = vadd.f32 0.0, %v2462
      %v2464 = vpop.f32.mrf.mxu0
      %v2465 = vadd.f32 0.0, %v2464
      %2466 = vmatmul.bf16.gmra.mxu0 %v2241
      %v2467 = vpop.f32.mrf.mxu0
      %v2468 = vadd.f32 0.0, %v2467
      %v2469 = vpop.f32.mrf.mxu0
      %v2470 = vadd.f32 0.0, %v2469
      %2471 = vmatmul.bf16.gmra.mxu0 %v2242
      %v2472 = vpop.f32.mrf.mxu0
      %v2473 = vadd.f32 0.0, %v2472
      %v2474 = vpop.f32.mrf.mxu0
      %v2475 = vadd.f32 0.0, %v2474
      %2476 = vmatmul.bf16.gmra.mxu0 %v2243
      %v2477 = vpop.f32.mrf.mxu0
      %v2478 = vadd.f32 0.0, %v2477
      %v2479 = vpop.f32.mrf.mxu0
      %v2480 = vadd.f32 0.0, %v2479
      %2481 = vmatmul.bf16.gmra.mxu0 %v2244
      %v2482 = vpop.f32.mrf.mxu0
      %v2483 = vadd.f32 0.0, %v2482
      %v2484 = vpop.f32.mrf.mxu0
      %v2485 = vadd.f32 0.0, %v2484
      %2486 = vmatmul.bf16.gmra.mxu0 %v2245
      %v2487 = vpop.f32.mrf.mxu0
      %v2488 = vadd.f32 0.0, %v2487
      %v2489 = vpop.f32.mrf.mxu0
      %v2490 = vadd.f32 0.0, %v2489
      %2491 = vmatmul.bf16.gmra.mxu0 %v2246
      %v2492 = vpop.f32.mrf.mxu0
      %v2493 = vadd.f32 0.0, %v2492
      %v2494 = vpop.f32.mrf.mxu0
      %v2495 = vadd.f32 0.0, %v2494
      %2496 = vmatmul.bf16.gmra.mxu0 %v2247
      %v2497 = vpop.f32.mrf.mxu0
      %v2498 = vadd.f32 0.0, %v2497
      %v2499 = vpop.f32.mrf.mxu0
      %v2500 = vadd.f32 0.0, %v2499
      %2501 = vmatmul.bf16.gmra.mxu0 %v2248
      %v2502 = vpop.f32.mrf.mxu0
      %v2503 = vadd.f32 0.0, %v2502
      %v2504 = vpop.f32.mrf.mxu0
      %v2505 = vadd.f32 0.0, %v2504
      %2506 = vmatmul.bf16.gmra.mxu0 %v2249
      %v2507 = vpop.f32.mrf.mxu0
      %v2508 = vadd.f32 0.0, %v2507
      %v2509 = vpop.f32.mrf.mxu0
      %v2510 = vadd.f32 0.0, %v2509
      %2511 = vmatmul.bf16.gmra.mxu0 %v2250
      %v2512 = vpop.f32.mrf.mxu0
      %v2513 = vadd.f32 0.0, %v2512
      %v2514 = vpop.f32.mrf.mxu0
      %v2515 = vadd.f32 0.0, %v2514
      %2516 = vmatmul.bf16.gmra.mxu0 %v2251
      %v2517 = vpop.f32.mrf.mxu0
      %v2518 = vadd.f32 0.0, %v2517
      %v2519 = vpop.f32.mrf.mxu0
      %v2520 = vadd.f32 0.0, %v2519
      %2521 = vmatmul.bf16.gmra.mxu0 %v2252
      %v2522 = vpop.f32.mrf.mxu0
      %v2523 = vadd.f32 0.0, %v2522
      %v2524 = vpop.f32.mrf.mxu0
      %v2525 = vadd.f32 0.0, %v2524
      %2526 = vdwg.mxu0
      %v2527 = vadd.f32 %v1692, %v2359
      %v2528 = vadd.f32 %v1693, %v2448
      %v2529 = vadd.f32 %v1694, %v2361
      %v2530 = vadd.f32 %v1695, %v2450
      %v2531 = vadd.f32 %v1696, %v2364
      %v2532 = vadd.f32 %v1697, %v2453
      %v2533 = vadd.f32 %v1698, %v2366
      %v2534 = vadd.f32 %v1699, %v2455
      %v2535 = vadd.f32 %v1700, %v2369
      %v2536 = vadd.f32 %v1701, %v2458
      %v2537 = vadd.f32 %v1702, %v2371
      %v2538 = vadd.f32 %v1703, %v2460
      %v2539 = vadd.f32 %v1704, %v2374
      %v2540 = vadd.f32 %v1705, %v2463
      %v2541 = vadd.f32 %v1706, %v2376
      %v2542 = vadd.f32 %v1707, %v2465
      %v2543 = vadd.f32 %v1708, %v2379
      %v2544 = vadd.f32 %v1709, %v2468
      %v2545 = vadd.f32 %v1710, %v2381
      %v2546 = vadd.f32 %v1711, %v2470
      %v2547 = vadd.f32 %v1712, %v2384
      %v2548 = vadd.f32 %v1713, %v2473
      %v2549 = vadd.f32 %v1714, %v2386
      %v2550 = vadd.f32 %v1715, %v2475
      %v2551 = vadd.f32 %v1716, %v2389
      %v2552 = vadd.f32 %v1717, %v2478
      %v2553 = vadd.f32 %v1718, %v2391
      %v2554 = vadd.f32 %v1719, %v2480
      %v2555 = vadd.f32 %v1720, %v2394
      %v2556 = vadd.f32 %v1721, %v2483
      %v2557 = vadd.f32 %v1722, %v2396
      %v2558 = vadd.f32 %v1723, %v2485
      %v2559 = vadd.f32 %v1724, %v2399
      %v2560 = vadd.f32 %v1725, %v2488
      %v2561 = vadd.f32 %v1726, %v2401
      %v2562 = vadd.f32 %v1727, %v2490
      %v2563 = vadd.f32 %v1728, %v2404
      %v2564 = vadd.f32 %v1729, %v2493
      %v2565 = vadd.f32 %v1730, %v2406
      %v2566 = vadd.f32 %v1731, %v2495
      %v2567 = vadd.f32 %v1732, %v2409
      %v2568 = vadd.f32 %v1733, %v2498
      %v2569 = vadd.f32 %v1734, %v2411
      %v2570 = vadd.f32 %v1735, %v2500
      %v2571 = vadd.f32 %v1736, %v2414
      %v2572 = vadd.f32 %v1737, %v2503
      %v2573 = vadd.f32 %v1738, %v2416
      %v2574 = vadd.f32 %v1739, %v2505
      %v2575 = vadd.f32 %v1740, %v2419
      %v2576 = vadd.f32 %v1741, %v2508
      %v2577 = vadd.f32 %v1742, %v2421
      %v2578 = vadd.f32 %v1743, %v2510
      %v2579 = vadd.f32 %v1744, %v2424
      %v2580 = vadd.f32 %v1745, %v2513
      %v2581 = vadd.f32 %v1746, %v2426
      %v2582 = vadd.f32 %v1747, %v2515
      %v2583 = vadd.f32 %v1748, %v2429
      %v2584 = vadd.f32 %v1749, %v2518
      %v2585 = vadd.f32 %v1750, %v2431
      %v2586 = vadd.f32 %v1751, %v2520
      %v2587 = vadd.f32 %v1752, %v2434
      %v2588 = vadd.f32 %v1753, %v2523
      %v2589 = vadd.f32 %v1754, %v2436
      %v2590 = vadd.f32 %v1755, %v2525
      %v2591 = vmax.f32 %v2527, 0.0
      %v2592 = vmax.f32 %v2528, 0.0
      %v2593 = vmax.f32 %v2529, 0.0
      %v2594 = vmax.f32 %v2530, 0.0
      %v2595 = vmax.f32 %v2531, 0.0
      %v2596 = vmax.f32 %v2532, 0.0
      %v2597 = vmax.f32 %v2533, 0.0
      %v2598 = vmax.f32 %v2534, 0.0
      %v2599 = vmax.f32 %v2535, 0.0
      %v2600 = vmax.f32 %v2536, 0.0
      %v2601 = vmax.f32 %v2537, 0.0
      %v2602 = vmax.f32 %v2538, 0.0
      %v2603 = vmax.f32 %v2539, 0.0
      %v2604 = vmax.f32 %v2540, 0.0
      %v2605 = vmax.f32 %v2541, 0.0
      %v2606 = vmax.f32 %v2542, 0.0
      %v2607 = vmax.f32 %v2543, 0.0
      %v2608 = vmax.f32 %v2544, 0.0
      %v2609 = vmax.f32 %v2545, 0.0
      %v2610 = vmax.f32 %v2546, 0.0
      %v2611 = vmax.f32 %v2547, 0.0
      %v2612 = vmax.f32 %v2548, 0.0
      %v2613 = vmax.f32 %v2549, 0.0
      %v2614 = vmax.f32 %v2550, 0.0
      %v2615 = vmax.f32 %v2551, 0.0
      %v2616 = vmax.f32 %v2552, 0.0
      %v2617 = vmax.f32 %v2553, 0.0
      %v2618 = vmax.f32 %v2554, 0.0
      %v2619 = vmax.f32 %v2555, 0.0
      %v2620 = vmax.f32 %v2556, 0.0
      %v2621 = vmax.f32 %v2557, 0.0
      %v2622 = vmax.f32 %v2558, 0.0
      %v2623 = vmax.f32 %v2559, 0.0
      %v2624 = vmax.f32 %v2560, 0.0
      %v2625 = vmax.f32 %v2561, 0.0
      %v2626 = vmax.f32 %v2562, 0.0
      %v2627 = vmax.f32 %v2563, 0.0
      %v2628 = vmax.f32 %v2564, 0.0
      %v2629 = vmax.f32 %v2565, 0.0
      %v2630 = vmax.f32 %v2566, 0.0
      %v2631 = vmax.f32 %v2567, 0.0
      %v2632 = vmax.f32 %v2568, 0.0
      %v2633 = vmax.f32 %v2569, 0.0
      %v2634 = vmax.f32 %v2570, 0.0
      %v2635 = vmax.f32 %v2571, 0.0
      %v2636 = vmax.f32 %v2572, 0.0
      %v2637 = vmax.f32 %v2573, 0.0
      %v2638 = vmax.f32 %v2574, 0.0
      %v2639 = vmax.f32 %v2575, 0.0
      %v2640 = vmax.f32 %v2576, 0.0
      %v2641 = vmax.f32 %v2577, 0.0
      %v2642 = vmax.f32 %v2578, 0.0
      %v2643 = vmax.f32 %v2579, 0.0
      %v2644 = vmax.f32 %v2580, 0.0
      %v2645 = vmax.f32 %v2581, 0.0
      %v2646 = vmax.f32 %v2582, 0.0
      %v2647 = vmax.f32 %v2583, 0.0
      %v2648 = vmax.f32 %v2584, 0.0
      %v2649 = vmax.f32 %v2585, 0.0
      %v2650 = vmax.f32 %v2586, 0.0
      %v2651 = vmax.f32 %v2587, 0.0
      %v2652 = vmax.f32 %v2588, 0.0
      %v2653 = vmax.f32 %v2589, 0.0
      %v2654 = vmax.f32 %v2590, 0.0
      %2655 = vst [vmem:[%s143] sm:$0xff] %v2591
      %2656 = vst [vmem:[%s143 + $0x8] sm:$0xff] %v2592
      %2657 = vst [vmem:[%s143 + $0x10] sm:$0xff] %v2593
      %2658 = vst [vmem:[%s143 + $0x18] sm:$0xff] %v2594
      %2659 = vst [vmem:[%s143 + $0x20] sm:$0xff] %v2595
      %2660 = vst [vmem:[%s143 + $0x28] sm:$0xff] %v2596
      %2661 = vst [vmem:[%s143 + $0x30] sm:$0xff] %v2597
      %2662 = vst [vmem:[%s143 + $0x38] sm:$0xff] %v2598
      %2663 = vst [vmem:[%s143 + $0x40] sm:$0xff] %v2599
      %2664 = vst [vmem:[%s143 + $0x48] sm:$0xff] %v2600
      %2665 = vst [vmem:[%s143 + $0x50] sm:$0xff] %v2601
      %2666 = vst [vmem:[%s143 + $0x58] sm:$0xff] %v2602
      %2667 = vst [vmem:[%s143 + $0x60] sm:$0xff] %v2603
      %2668 = vst [vmem:[%s143 + $0x68] sm:$0xff] %v2604
      %2669 = vst [vmem:[%s143 + $0x70] sm:$0xff] %v2605
      %2670 = vst [vmem:[%s143 + $0x78] sm:$0xff] %v2606
      %2671 = vst [vmem:[%s143 + $0x80] sm:$0xff] %v2607
      %2672 = vst [vmem:[%s143 + $0x88] sm:$0xff] %v2608
      %2673 = vst [vmem:[%s143 + $0x90] sm:$0xff] %v2609
      %2674 = vst [vmem:[%s143 + $0x98] sm:$0xff] %v2610
      %2675 = vst [vmem:[%s143 + $0xa0] sm:$0xff] %v2611
      %2676 = vst [vmem:[%s143 + $0xa8] sm:$0xff] %v2612
      %2677 = vst [vmem:[%s143 + $0xb0] sm:$0xff] %v2613
      %2678 = vst [vmem:[%s143 + $0xb8] sm:$0xff] %v2614
      %2679 = vst [vmem:[%s143 + $0xc0] sm:$0xff] %v2615
      %2680 = vst [vmem:[%s143 + $0xc8] sm:$0xff] %v2616
      %2681 = vst [vmem:[%s143 + $0xd0] sm:$0xff] %v2617
      %2682 = vst [vmem:[%s143 + $0xd8] sm:$0xff] %v2618
      %2683 = vst [vmem:[%s143 + $0xe0] sm:$0xff] %v2619
      %2684 = vst [vmem:[%s143 + $0xe8] sm:$0xff] %v2620
      %2685 = vst [vmem:[%s143 + $0xf0] sm:$0xff] %v2621
      %2686 = vst [vmem:[%s143 + $0xf8] sm:$0xff] %v2622
      %2687 = vst [vmem:[%s143 + $0x100] sm:$0xff] %v2623
      %2688 = vst [vmem:[%s143 + $0x108] sm:$0xff] %v2624
      %2689 = vst [vmem:[%s143 + $0x110] sm:$0xff] %v2625
      %2690 = vst [vmem:[%s143 + $0x118] sm:$0xff] %v2626
      %2691 = vst [vmem:[%s143 + $0x120] sm:$0xff] %v2627
      %2692 = vst [vmem:[%s143 + $0x128] sm:$0xff] %v2628
      %2693 = vst [vmem:[%s143 + $0x130] sm:$0xff] %v2629
      %2694 = vst [vmem:[%s143 + $0x138] sm:$0xff] %v2630
      %2695 = vst [vmem:[%s143 + $0x140] sm:$0xff] %v2631
      %2696 = vst [vmem:[%s143 + $0x148] sm:$0xff] %v2632
      %2697 = vst [vmem:[%s143 + $0x150] sm:$0xff] %v2633
      %2698 = vst [vmem:[%s143 + $0x158] sm:$0xff] %v2634
      %2699 = vst [vmem:[%s143 + $0x160] sm:$0xff] %v2635
      %2700 = vst [vmem:[%s143 + $0x168] sm:$0xff] %v2636
      %2701 = vst [vmem:[%s143 + $0x170] sm:$0xff] %v2637
      %2702 = vst [vmem:[%s143 + $0x178] sm:$0xff] %v2638
      %2703 = vst [vmem:[%s143 + $0x180] sm:$0xff] %v2639
      %2704 = vst [vmem:[%s143 + $0x188] sm:$0xff] %v2640
      %2705 = vst [vmem:[%s143 + $0x190] sm:$0xff] %v2641
      %2706 = vst [vmem:[%s143 + $0x198] sm:$0xff] %v2642
      %2707 = vst [vmem:[%s143 + $0x1a0] sm:$0xff] %v2643
      %2708 = vst [vmem:[%s143 + $0x1a8] sm:$0xff] %v2644
      %2709 = vst [vmem:[%s143 + $0x1b0] sm:$0xff] %v2645
      %2710 = vst [vmem:[%s143 + $0x1b8] sm:$0xff] %v2646
      %2711 = vst [vmem:[%s143 + $0x1c0] sm:$0xff] %v2647
      %2712 = vst [vmem:[%s143 + $0x1c8] sm:$0xff] %v2648
      %2713 = vst [vmem:[%s143 + $0x1d0] sm:$0xff] %v2649
      %2714 = vst [vmem:[%s143 + $0x1d8] sm:$0xff] %v2650
      %2715 = vst [vmem:[%s143 + $0x1e0] sm:$0xff] %v2651
      %2716 = vst [vmem:[%s143 + $0x1e8] sm:$0xff] %v2652
      %2717 = vst [vmem:[%s143 + $0x1f0] sm:$0xff] %v2653
      %2718 = vst [vmem:[%s143 + $0x1f8] sm:$0xff] %v2654
      %p2719 = scmp.lt.s32.totalorder %s13, 1
      %s2720 = scalar_select %p2719, %s13, 1
      %s2721 = smul.addr %s2720, 64
      %s2722 = smul.addr %s2721, 8
      %s2723 = scalar_lea.vmem %s2, %s2722
      // Predicated region
      $region29: #{model_forward.1} parent=27 // pred_check
        %p2724 = pneg %p78
      $region30: #{model_forward.1} parent=27 // pred_check_branch
        %2726 = sbr.rel (%p2724) target = $region32
      $region31: #{model_forward.1} parent=27 // pred_region
        _
      $region32: #{model_forward.1} parent=27 // pred_fallthru
        _
    $region28: #{model_forward.1} parent=5 // pred_fallthru
      _
    %p2727 = scmp.le.s32.totalorder 2, %s8
    // Predicated region
    $region33: #{model_forward.1} parent=5 // pred_check
      %p2728 = pneg %p2727
    $region34: #{model_forward.1} parent=5 // pred_check_branch
      %2730 = sbr.rel (%p2728) target = $region36
    $region35: #{model_forward.1} parent=5 // pred_region
      %s2731 = ssub.s32 %s8, 2
      // Predicated region
      $region37: #{model_forward.1} parent=35 // pred_check
        %p2732 = pneg %p84
      $region38: #{model_forward.1} parent=35 // pred_check_branch
        %2734 = sbr.rel (%p2732) target = $region40
      $region39: #{model_forward.1} parent=35 // pred_region
        %p2735 = scmp.lt.s32.totalorder %s14, 1
        %s2736 = scalar_select %p2735, %s14, 1
        %s2737 = smul.addr %s2736, 64
        %s2738 = smul.addr %s2737, 8
        %s2739 = scalar_lea.vmem %s2, %s2738
      $region40: #{model_forward.1} parent=35 // pred_fallthru
        _
    $region36: #{model_forward.1} parent=5 // pred_fallthru
      _
  $region6: #{model_forward.1} parent=0 // loop_footer
    %s12 = sadd.s32 1, %s8
  $region7: #{model_forward.1} parent=0 // loop_footer_branch
    %7 = sbr.rel target = $region3
  $region8: #{model_forward.1} parent=0 // loop_exit
    _

</llo_original>
